<compile_context>
chip_gen: v6e
topology: v6e:2x2x1
jax: 0.10.0
libtpu: 0.0.40
codegen_flags: <defaults>
</compile_context>

<pallas_src>
from functools import partial

import jax
import jax.numpy as jnp
from jax.experimental import pallas as pl
from jax.experimental.pallas import tpu as pltpu

D_MODEL = 32
DEXTRA_PROJ = 2
PROJ_DIM = D_MODEL // DEXTRA_PROJ          # 16
ENC_FFN_RED = 4
LIGHT_FFN = D_MODEL // ENC_FFN_RED         # 8

# --------------- packed parameter layout (static, shared packer/kernel) ------
MAT_COLS = 3 * PROJ_DIM                                   # 48 (widest: wqkv)
_MAT_LAYOUT = [
    ("wd1",  D_MODEL,   PROJ_DIM),
    ("wd2",  PROJ_DIM,  PROJ_DIM),
    ("wqkv", PROJ_DIM,  3 * PROJ_DIM),   # fused Q|K|V projection (one MXU push)
    ("wo",   PROJ_DIM,  D_MODEL),
    ("w1",   D_MODEL,   LIGHT_FFN),
    ("w2",   LIGHT_FFN, D_MODEL),
    ("wtop", D_MODEL,   D_MODEL),   # Linear(2D->D, bias=False): intra-feat rows
    ("wbot", D_MODEL,   D_MODEL),   # Linear(2D->D, bias=False): inter-feat rows
]
_MAT_OFF = {}
_row = 0
for _name, _rows, _cols in _MAT_LAYOUT:
    _MAT_OFF[_name] = (_row, _rows, _cols)
    _row += _rows
MAT_ROWS = _row                                           # 184

VEC_COLS = 3 * PROJ_DIM                                   # 48 (widest: bqkv)
_VEC_LAYOUT = [
    ("ln_attn_g", D_MODEL), ("ln_attn_b", D_MODEL),
    ("bd1", PROJ_DIM), ("lnd1_g", PROJ_DIM), ("lnd1_b", PROJ_DIM),
    ("bd2", PROJ_DIM), ("lnd2_g", PROJ_DIM), ("lnd2_b", PROJ_DIM),
    ("bqkv", 3 * PROJ_DIM),
    ("bo", D_MODEL), ("ln_fin_g", D_MODEL), ("ln_fin_b", D_MODEL),
    ("b1", LIGHT_FFN), ("b2", D_MODEL),
    ("prop_ln_g", D_MODEL), ("prop_ln_b", D_MODEL),
]
_VEC_OFF = {name: i for i, (name, _) in enumerate(_VEC_LAYOUT)}
_VEC_DIM = dict(_VEC_LAYOUT)
VEC_ROWS = len(_VEC_LAYOUT)                               # 16


# ------------------------------ kernel helpers -------------------------------
def _layernorm(x, g, b, eps=1e-5):
    m = jnp.mean(x, axis=-1, keepdims=True)
    v = jnp.mean((x - m) ** 2, axis=-1, keepdims=True)
    return (x - m) * jax.lax.rsqrt(v + eps) * g + b


def _gelu(x):
    # tanh-approx GELU (erf-free; lowers cleanly to VPU/EUP)
    return jax.nn.gelu(x, approximate=True)


def _mat(wmat_ref, name):                 # static slice of the packed matrices
    r0, rows, cols = _MAT_OFF[name]
    return wmat_ref[r0:r0 + rows, :cols]  # bf16


def _vec(wvec_ref, name):                 # static slice of the packed vectors
    i = _VEC_OFF[name]
    return wvec_ref[i:i + 1, :_VEC_DIM[name]]  # f32, (1, dim)


def _bdot(a, b):                          # bf16 MXU matmul, f32 accumulation
    return jnp.dot(a.astype(jnp.bfloat16), b.astype(jnp.bfloat16),
                   preferred_element_type=jnp.float32)


# ---------------------- DeLiTr encoder layer kernel (per batch) --------------
def encoder_kernel(x_ref, kpm_ref, wmat_ref, wvec_ref, enc_ref):
    P = PROJ_DIM
    mat = lambda n: _mat(wmat_ref, n)
    vec = lambda n: _vec(wvec_ref, n)

    x = x_ref[0].astype(jnp.float32)      # (S, D)
    kpm = kpm_ref[0]                      # (1, S), 1.0 where window is padded

    # --- self-attention block (normalize_before=True) ---
    residual = x
    xn = _layernorm(x, vec("ln_attn_g"), vec("ln_attn_b"))

    # DExTra unit (simplified D -> P bottleneck)
    # TODO(synk): full DeLighT DExTraUnit group-linear pyramid not reproduced
    # (its source was not provided); a 2-layer GELU+LN projection is used.
    h = _gelu(_bdot(xn, mat("wd1")) + vec("bd1"))
    h = _layernorm(h, vec("lnd1_g"), vec("lnd1_b"))
    h = _gelu(_bdot(h, mat("wd2")) + vec("bd2"))
    h = _layernorm(h, vec("lnd2_g"), vec("lnd2_b"))

    # fused Q/K/V projection; attention scale is pre-folded into Q cols / bias
    qkv = _bdot(h, mat("wqkv")) + vec("bqkv")           # (S, 3P)
    q = qkv[:, 0 * P:1 * P]
    k = qkv[:, 1 * P:2 * P]
    v = qkv[:, 2 * P:3 * P]

    # contract last dims directly (no explicit k.T transpose)
    scores = jnp.einsum("qd,kd->qk",
                        q.astype(jnp.bfloat16), k.astype(jnp.bfloat16),
                        preferred_element_type=jnp.float32)   # (S, S)
    scores = scores + kpm * (-1e9)                      # key-padding mask in-kernel
    m = jnp.max(scores, axis=-1, keepdims=True)
    p = jnp.exp(scores - m)
    denom = jnp.sum(p, axis=-1, keepdims=True)
    p = p * pl.reciprocal(denom, approx=True)           # divide on the EUP slot
    ctx = _bdot(p, v)                                   # (S, P)
    attn_out = _bdot(ctx, mat("wo")) + vec("bo")        # (S, D)
    x = residual + attn_out

    # --- light FFN block ---
    residual = x
    xn = _layernorm(x, vec("ln_fin_g"), vec("ln_fin_b"))
    hh = _gelu(_bdot(xn, mat("w1")) + vec("b1"))
    hh = _bdot(hh, mat("w2")) + vec("b2")
    enc_ref[0] = (residual + hh).astype(enc_ref.dtype)


# -------------------- VoxelFeaturePropagation kernel (per M-tile) ------------
def propagation_kernel(vfeat_ref, idx_ref, enc_ref, wmat_ref, wvec_ref, o_ref):
    BS = enc_ref.shape[0]
    tm = vfeat_ref.shape[0]
    mat = lambda n: _mat(wmat_ref, n)
    vec = lambda n: _vec(wvec_ref, n)

    # per-voxel gather of its window's encoder output as a one-hot matmul,
    # bounded to (tm, B*S) per tile.
    # TODO(synk): switch to a scalar-prefetch row gather if B*max_win grows
    # beyond a few hundred windows.
    ids = idx_ref[...]                                        # (tm, 1) int32
    lanes = jax.lax.broadcasted_iota(jnp.int32, (tm, BS), 1)
    onehot = (lanes == ids).astype(jnp.bfloat16)              # (tm, BS)
    gathered = jnp.dot(onehot, enc_ref[...].astype(jnp.bfloat16),
                       preferred_element_type=jnp.float32)    # (tm, D)

    # concat([intra, inter], -1) @ W (bias=False) -> LayerNorm -> ReLU
    # (cat(a, g) @ W == a @ Wtop + g @ Wbot)
    a = vfeat_ref[...]
    y = _bdot(a, mat("wtop")) + _bdot(gathered, mat("wbot"))
    y = _layernorm(y, vec("prop_ln_g"), vec("prop_ln_b"))
    o_ref[...] = jnp.maximum(y, 0.0).astype(o_ref.dtype)


# --------------------------------- JAX glue ----------------------------------
def pos_emb_wins(win_num_xy, d):
    """Sine/cosine window positional embedding (ndim=2 branch of the module)."""
    win_x, win_y = win_num_xy
    max_win = win_x * win_y
    s = jnp.arange(max_win)
    wy = (s // win_x).astype(jnp.float32) - win_y / 2.0
    wx = (s % win_x).astype(jnp.float32) - win_x / 2.0
    pos_length = d // 2
    idx = jnp.arange(pos_length, dtype=jnp.float32)
    inv_freq = 10000.0 ** (2.0 * jnp.floor(idx / 2.0) / pos_length)

    def interleave(e):
        si = jnp.sin(e[:, 0::2])
        co = jnp.cos(e[:, 1::2])
        return jnp.stack([si, co], axis=-1).reshape(e.shape[0], -1)

    ex = interleave(wx[:, None] / inv_freq[None, :])
    ey = interleave(wy[:, None] / inv_freq[None, :])
    return jnp.concatenate([ex, ey], axis=-1)          # (max_win, d)


@partial(jax.jit, static_argnames=("win_num_xy", "batch_size", "tile_m"))
def inter_region_transformer_encoder(voxel_feat, win_inds_bzyx, params,
                                     *, win_num_xy, batch_size, tile_m=512):
    M, D = voxel_feat.shape
    win_x, win_y = win_num_xy
    S = win_x * win_y
    B = batch_size                                      # static (no host sync)
    BS = B * S

    b_idx = win_inds_bzyx[:, 0]
    wy = win_inds_bzyx[:, 2]
    wx = win_inds_bzyx[:, 3]

    # --- VoxelFeatureRegionAggregation (DynamicScatterCustom mean) ---
    # TODO(synk): data-dependent scatter-mean stays in plain JAX (segment_sum).
    flat_idx = (b_idx * S + wy * win_x + wx).astype(jnp.int32)   # flat2batch_inds
    sums = jax.ops.segment_sum(voxel_feat, flat_idx, num_segments=BS)
    counts = jax.ops.segment_sum(jnp.ones((M,), jnp.float32), flat_idx,
                                 num_segments=BS)
    occupied = counts > 0
    means = sums / jnp.maximum(counts, 1.0)[:, None]    # (BS, D)
    feat = means.reshape(B, S, D)
    pos = pos_emb_wins(win_num_xy, D)                   # (S, D)
    pos_b = pos[None] * occupied.reshape(B, S, 1).astype(jnp.float32)
    x = feat + pos_b                                    # (B, S, D)

    # key-padding mask (1.0 where window empty); applied in-kernel (no (B,S,S)
    # dense bias materialized or DMA'd)
    kpm = (~occupied).astype(jnp.float32).reshape(B, 1, S)

    vmem_full = pl.BlockSpec(memory_space=pltpu.MemorySpace.VMEM)
    cparams = pltpu.CompilerParams(dimension_semantics=("parallel",),
                                   vmem_limit_bytes=32 * 1024 * 1024)

    # ---------------- DeLiTr encoder layer: grid over B ----------------------
    enc_cost = pl.CostEstimate(
        flops=2 * BS * (D * PROJ_DIM + PROJ_DIM * PROJ_DIM
                        + PROJ_DIM * 3 * PROJ_DIM + 2 * S * PROJ_DIM
                        + PROJ_DIM * D + 2 * D * LIGHT_FFN),
        transcendentals=BS * (S + 2 * PROJ_DIM + LIGHT_FFN),
        bytes_accessed=2 * BS * D * 4 + BS * 4
                       + MAT_ROWS * MAT_COLS * 2 + VEC_ROWS * VEC_COLS * 4)
    enc = pl.pallas_call(
        encoder_kernel,
        out_shape=jax.ShapeDtypeStruct((B, S, D), jnp.float32),
        grid=(B,),
        in_specs=[pl.BlockSpec((1, S, D), lambda b: (b, 0, 0)),
                  pl.BlockSpec((1, 1, S), lambda b: (b, 0, 0)),
                  vmem_full, vmem_full],
        out_specs=pl.BlockSpec((1, S, D), lambda b: (b, 0, 0)),
        compiler_params=cparams,
        cost_estimate=enc_cost,
    )(x, kpm, params["wmat"], params["wvec"])
    enc_flat = enc.reshape(BS, D)                       # (B*S, D)

    # ------------- VoxelFeaturePropagation: grid over M tiles ----------------
    tm = min(tile_m, ((M + 7) // 8) * 8)                # multiple of 8
    M_pad = ((M + tm - 1) // tm) * tm
    if M_pad != M:
        vfeat_p = jnp.pad(voxel_feat, ((0, M_pad - M), (0, 0)))
        idx_p = jnp.pad(flat_idx, (0, M_pad - M))       # pad with valid slot 0
    else:
        vfeat_p, idx_p = voxel_feat, flat_idx
    idx2d = idx_p.reshape(M_pad, 1)

    prop_cost = pl.CostEstimate(
        flops=2 * M_pad * (BS * D + 2 * D * D),
        transcendentals=0,
        bytes_accessed=2 * M_pad * D * 4 + M_pad * 4 + BS * D * 4
                       + MAT_ROWS * MAT_COLS * 2 + VEC_ROWS * VEC_COLS * 4)
    out = pl.pallas_call(
        propagation_kernel,
        out_shape=jax.ShapeDtypeStruct((M_pad, D), jnp.float32),
        grid=(M_pad // tm,),
        in_specs=[pl.BlockSpec((tm, D), lambda i: (i, 0)),
                  pl.BlockSpec((tm, 1), lambda i: (i, 0)),
                  vmem_full, vmem_full, vmem_full],
        out_specs=pl.BlockSpec((tm, D), lambda i: (i, 0)),
        compiler_params=cparams,
        cost_estimate=prop_cost,
    )(vfeat_p, idx2d, enc_flat, params["wmat"], params["wvec"])
    return out[:M]


# ----------------------------- deterministic params --------------------------
def init_params(key):
    keys = jax.random.split(key, len(_MAT_LAYOUT))
    wmat = jnp.zeros((MAT_ROWS, MAT_COLS), jnp.float32)
    scale = float(PROJ_DIM) ** -0.5
    for k, (name, rows, cols) in zip(keys, _MAT_LAYOUT):
        r0 = _MAT_OFF[name][0]
        w = jax.random.normal(k, (rows, cols), jnp.float32) * 0.05
        if name == "wqkv":                 # fold attention scale into Q columns
            w = w.at[:, :PROJ_DIM].multiply(scale)
        wmat = wmat.at[r0:r0 + rows, :cols].set(w)
    wmat = wmat.astype(jnp.bfloat16)       # bf16 MXU operands, f32 accumulation

    wvec = jnp.zeros((VEC_ROWS, VEC_COLS), jnp.float32)
    for name, n in _VEC_LAYOUT:
        if name.endswith("_g"):                         # LayerNorm gains -> 1
            wvec = wvec.at[_VEC_OFF[name], :n].set(1.0)
    # fold the attention scale into the Q part of the fused bias as well
    wvec = wvec.at[_VEC_OFF["bqkv"], :PROJ_DIM].multiply(scale)
    return {"wmat": wmat, "wvec": wvec}


if __name__ == "__main__":
    key = jax.random.PRNGKey(0)
    k_feat, k_yx, k_param = jax.random.split(key, 3)

    M = 64                     # number of voxels
    win_num_xy = (4, 4)        # -> seq_len (windows per batch) = 16
    B = 2

    voxel_feat = jax.random.normal(k_feat, (M, D_MODEL), jnp.float32)
    yx = jax.random.randint(k_yx, (M, 2), 0, 4, dtype=jnp.int32)
    b_col = jnp.concatenate([jnp.zeros((M // 2,), jnp.int32),
                             jnp.ones((M - M // 2,), jnp.int32)])
    z_col = jnp.zeros((M,), jnp.int32)
    win_inds_bzyx = jnp.stack([b_col, z_col, yx[:, 0], yx[:, 1]], axis=1)  # (M,4)

    params = init_params(k_param)
    out = inter_region_transformer_encoder(voxel_feat, win_inds_bzyx, params,
                                           win_num_xy=win_num_xy, batch_size=B)
    jax.block_until_ready(out)
    assert out.shape == (M, D_MODEL) and out.dtype == jnp.float32
    assert bool(jnp.all(jnp.isfinite(out)))
    print("KERNEL_OK")
</pallas_src>

<mosaic_0001>
module attributes {stable_mosaic.version = 11 : i64} {
  func.func private @main(%arg0: i32) attributes {dimension_semantics = [#tpu.dimension_semantics<core_parallel>], iteration_bounds = array<i64: 2>, tpu.core_type = #tpu.core_type<sc_scalar_subcore>, window_params = []} {
    return
  }
}

module attributes {stable_mosaic.version = 11 : i64} {
  func.func private @main(%arg0: i32) attributes {dimension_semantics = [#tpu.dimension_semantics<core_parallel>], iteration_bounds = array<i64: 2>, tpu.core_type = #tpu.core_type<sc_scalar_subcore>, window_params = []} {
    return
  }
}

module attributes {stable_mosaic.version = 11 : i64} {
  func.func @encoder_kernel(%arg0: i32, %arg1: memref<1x16x32xf32, #tpu.memory_space<vmem>>, %arg2: memref<1x1x16xf32, #tpu.memory_space<vmem>>, %arg3: memref<184x48xbf16, #tpu.memory_space<vmem>>, %arg4: memref<16x48xf32, #tpu.memory_space<vmem>>, %arg5: memref<1x16x32xf32, #tpu.memory_space<vmem>>) attributes {dimension_semantics = [#tpu.dimension_semantics<parallel>], iteration_bounds = array<i64: 2>, scalar_prefetch = 0 : i64, scratch_operands = 0 : i64, tpu.core_type = #tpu.core_type<tc>, window_params = [{transform_indices = @transform_0, window_bounds = array<i64: 1, 16, 32>}, {transform_indices = @transform_1, window_bounds = array<i64: 1, 1, 16>}, {pipeline_mode = #tpu.pipeline_mode<synchronous>, transform_indices = @transform_2, window_bounds = array<i64: 184, 48>}, {pipeline_mode = #tpu.pipeline_mode<synchronous>, transform_indices = @transform_3, window_bounds = array<i64: 16, 48>}, {transform_indices = @transform_4, window_bounds = array<i64: 1, 16, 32>}]} {
    %c0 = arith.constant 0 : index
    %c0_0 = arith.constant 0 : index
    %c0_1 = arith.constant 0 : index
    %0 = vector.load %arg1[%c0, %c0_0, %c0_1] : memref<1x16x32xf32, #tpu.memory_space<vmem>>, vector<1x16x32xf32>
    %1 = vector.shape_cast %0 : vector<1x16x32xf32> to vector<16x32xf32>
    %c0_2 = arith.constant 0 : index
    %c0_3 = arith.constant 0 : index
    %c0_4 = arith.constant 0 : index
    %2 = vector.load %arg2[%c0_2, %c0_3, %c0_4] : memref<1x1x16xf32, #tpu.memory_space<vmem>>, vector<1x1x16xf32>
    %3 = vector.shape_cast %2 : vector<1x1x16xf32> to vector<1x16xf32>
    %c0_5 = arith.constant 0 : index
    %c0_6 = arith.constant 0 : index
    %4 = vector.load %arg4[%c0_5, %c0_6] : memref<16x48xf32, #tpu.memory_space<vmem>>, vector<1x32xf32>
    %c1 = arith.constant 1 : index
    %c0_7 = arith.constant 0 : index
    %5 = vector.load %arg4[%c1, %c0_7] : memref<16x48xf32, #tpu.memory_space<vmem>>, vector<1x32xf32>
    %cst = arith.constant dense<0.000000e+00> : vector<16xf32>
    %6 = vector.multi_reduction <add>, %1, %cst [1] : vector<16x32xf32> to vector<16xf32>
    %7 = vector.shape_cast %6 : vector<16xf32> to vector<16x1xf32>
    %cst_8 = arith.constant 3.200000e+01 : f32
    %8 = vector.broadcast %cst_8 : f32 to vector<16x1xf32>
    %9 = arith.divf %7, %8 : vector<16x1xf32>
    %10 = vector.broadcast %9 : vector<16x1xf32> to vector<16x32xf32>
    %11 = arith.subf %1, %10 : vector<16x32xf32>
    %12 = arith.mulf %11, %11 : vector<16x32xf32>
    %cst_9 = arith.constant dense<0.000000e+00> : vector<16xf32>
    %13 = vector.multi_reduction <add>, %12, %cst_9 [1] : vector<16x32xf32> to vector<16xf32>
    %14 = vector.shape_cast %13 : vector<16xf32> to vector<16x1xf32>
    %cst_10 = arith.constant 3.200000e+01 : f32
    %15 = vector.broadcast %cst_10 : f32 to vector<16x1xf32>
    %16 = arith.divf %14, %15 : vector<16x1xf32>
    %17 = vector.broadcast %9 : vector<16x1xf32> to vector<16x32xf32>
    %18 = arith.subf %1, %17 : vector<16x32xf32>
    %cst_11 = arith.constant 9.99999974E-6 : f32
    %19 = vector.broadcast %cst_11 : f32 to vector<16x1xf32>
    %20 = arith.addf %16, %19 : vector<16x1xf32>
    %21 = math.rsqrt %20 : vector<16x1xf32>
    %22 = vector.broadcast %21 : vector<16x1xf32> to vector<16x32xf32>
    %23 = arith.mulf %18, %22 : vector<16x32xf32>
    %24 = vector.broadcast %4 : vector<1x32xf32> to vector<16x32xf32>
    %25 = arith.mulf %23, %24 : vector<16x32xf32>
    %26 = vector.broadcast %5 : vector<1x32xf32> to vector<16x32xf32>
    %27 = arith.addf %25, %26 : vector<16x32xf32>
    %c0_12 = arith.constant 0 : index
    %c0_13 = arith.constant 0 : index
    %28 = vector.load %arg3[%c0_12, %c0_13] : memref<184x48xbf16, #tpu.memory_space<vmem>>, vector<32x16xbf16>
    %29 = arith.truncf %27 : vector<16x32xf32> to vector<16x32xbf16>
    %cst_14 = arith.constant dense<0.000000e+00> : vector<16x16xf32>
    %30 = tpu.matmul %29, %28, %cst_14 {dimension_numbers = #tpu.dot_dimension_numbers<[1], [0], [0], [1], [0, 0, 1, 1], [], []>} : vector<16x32xbf16>, vector<32x16xbf16>, vector<16x16xf32> -> vector<16x16xf32>
    %c2 = arith.constant 2 : index
    %c0_15 = arith.constant 0 : index
    %31 = vector.load %arg4[%c2, %c0_15] : memref<16x48xf32, #tpu.memory_space<vmem>>, vector<1x16xf32>
    %32 = vector.broadcast %31 : vector<1x16xf32> to vector<16x16xf32>
    %33 = arith.addf %30, %32 : vector<16x16xf32>
    %34 = arith.mulf %33, %33 : vector<16x16xf32>
    %35 = arith.mulf %33, %34 : vector<16x16xf32>
    %cst_16 = arith.constant 4.471500e-02 : f32
    %36 = vector.broadcast %cst_16 : f32 to vector<16x16xf32>
    %37 = arith.mulf %36, %35 : vector<16x16xf32>
    %38 = arith.addf %33, %37 : vector<16x16xf32>
    %cst_17 = arith.constant 0.797884583 : f32
    %39 = vector.broadcast %cst_17 : f32 to vector<16x16xf32>
    %40 = arith.mulf %39, %38 : vector<16x16xf32>
    %41 = math.tanh %40 : vector<16x16xf32>
    %cst_18 = arith.constant 1.000000e+00 : f32
    %42 = vector.broadcast %cst_18 : f32 to vector<16x16xf32>
    %43 = arith.addf %42, %41 : vector<16x16xf32>
    %cst_19 = arith.constant 5.000000e-01 : f32
    %44 = vector.broadcast %cst_19 : f32 to vector<16x16xf32>
    %45 = arith.mulf %44, %43 : vector<16x16xf32>
    %46 = arith.mulf %33, %45 : vector<16x16xf32>
    %c3 = arith.constant 3 : index
    %c0_20 = arith.constant 0 : index
    %47 = vector.load %arg4[%c3, %c0_20] : memref<16x48xf32, #tpu.memory_space<vmem>>, vector<1x16xf32>
    %c4 = arith.constant 4 : index
    %c0_21 = arith.constant 0 : index
    %48 = vector.load %arg4[%c4, %c0_21] : memref<16x48xf32, #tpu.memory_space<vmem>>, vector<1x16xf32>
    %cst_22 = arith.constant dense<0.000000e+00> : vector<16xf32>
    %49 = vector.multi_reduction <add>, %46, %cst_22 [1] : vector<16x16xf32> to vector<16xf32>
    %50 = vector.shape_cast %49 : vector<16xf32> to vector<16x1xf32>
    %cst_23 = arith.constant 1.600000e+01 : f32
    %51 = vector.broadcast %cst_23 : f32 to vector<16x1xf32>
    %52 = arith.divf %50, %51 : vector<16x1xf32>
    %53 = vector.broadcast %52 : vector<16x1xf32> to vector<16x16xf32>
    %54 = arith.subf %46, %53 : vector<16x16xf32>
    %55 = arith.mulf %54, %54 : vector<16x16xf32>
    %cst_24 = arith.constant dense<0.000000e+00> : vector<16xf32>
    %56 = vector.multi_reduction <add>, %55, %cst_24 [1] : vector<16x16xf32> to vector<16xf32>
    %57 = vector.shape_cast %56 : vector<16xf32> to vector<16x1xf32>
    %cst_25 = arith.constant 1.600000e+01 : f32
    %58 = vector.broadcast %cst_25 : f32 to vector<16x1xf32>
    %59 = arith.divf %57, %58 : vector<16x1xf32>
    %60 = vector.broadcast %52 : vector<16x1xf32> to vector<16x16xf32>
    %61 = arith.subf %46, %60 : vector<16x16xf32>
    %cst_26 = arith.constant 9.99999974E-6 : f32
    %62 = vector.broadcast %cst_26 : f32 to vector<16x1xf32>
    %63 = arith.addf %59, %62 : vector<16x1xf32>
    %64 = math.rsqrt %63 : vector<16x1xf32>
    %65 = vector.broadcast %64 : vector<16x1xf32> to vector<16x16xf32>
    %66 = arith.mulf %61, %65 : vector<16x16xf32>
    %67 = vector.broadcast %47 : vector<1x16xf32> to vector<16x16xf32>
    %68 = arith.mulf %66, %67 : vector<16x16xf32>
    %69 = vector.broadcast %48 : vector<1x16xf32> to vector<16x16xf32>
    %70 = arith.addf %68, %69 : vector<16x16xf32>
    %c32 = arith.constant 32 : index
    %c0_27 = arith.constant 0 : index
    %71 = vector.load %arg3[%c32, %c0_27] : memref<184x48xbf16, #tpu.memory_space<vmem>>, vector<16x16xbf16>
    %72 = arith.truncf %70 : vector<16x16xf32> to vector<16x16xbf16>
    %cst_28 = arith.constant dense<0.000000e+00> : vector<16x16xf32>
    %73 = tpu.matmul %72, %71, %cst_28 {dimension_numbers = #tpu.dot_dimension_numbers<[1], [0], [0], [1], [0, 0, 1, 1], [], []>} : vector<16x16xbf16>, vector<16x16xbf16>, vector<16x16xf32> -> vector<16x16xf32>
    %c5 = arith.constant 5 : index
    %c0_29 = arith.constant 0 : index
    %74 = vector.load %arg4[%c5, %c0_29] : memref<16x48xf32, #tpu.memory_space<vmem>>, vector<1x16xf32>
    %75 = vector.broadcast %74 : vector<1x16xf32> to vector<16x16xf32>
    %76 = arith.addf %73, %75 : vector<16x16xf32>
    %77 = arith.mulf %76, %76 : vector<16x16xf32>
    %78 = arith.mulf %76, %77 : vector<16x16xf32>
    %cst_30 = arith.constant 4.471500e-02 : f32
    %79 = vector.broadcast %cst_30 : f32 to vector<16x16xf32>
    %80 = arith.mulf %79, %78 : vector<16x16xf32>
    %81 = arith.addf %76, %80 : vector<16x16xf32>
    %cst_31 = arith.constant 0.797884583 : f32
    %82 = vector.broadcast %cst_31 : f32 to vector<16x16xf32>
    %83 = arith.mulf %82, %81 : vector<16x16xf32>
    %84 = math.tanh %83 : vector<16x16xf32>
    %cst_32 = arith.constant 1.000000e+00 : f32
    %85 = vector.broadcast %cst_32 : f32 to vector<16x16xf32>
    %86 = arith.addf %85, %84 : vector<16x16xf32>
    %cst_33 = arith.constant 5.000000e-01 : f32
    %87 = vector.broadcast %cst_33 : f32 to vector<16x16xf32>
    %88 = arith.mulf %87, %86 : vector<16x16xf32>
    %89 = arith.mulf %76, %88 : vector<16x16xf32>
    %c6 = arith.constant 6 : index
    %c0_34 = arith.constant 0 : index
    %90 = vector.load %arg4[%c6, %c0_34] : memref<16x48xf32, #tpu.memory_space<vmem>>, vector<1x16xf32>
    %c7 = arith.constant 7 : index
    %c0_35 = arith.constant 0 : index
    %91 = vector.load %arg4[%c7, %c0_35] : memref<16x48xf32, #tpu.memory_space<vmem>>, vector<1x16xf32>
    %cst_36 = arith.constant dense<0.000000e+00> : vector<16xf32>
    %92 = vector.multi_reduction <add>, %89, %cst_36 [1] : vector<16x16xf32> to vector<16xf32>
    %93 = vector.shape_cast %92 : vector<16xf32> to vector<16x1xf32>
    %cst_37 = arith.constant 1.600000e+01 : f32
    %94 = vector.broadcast %cst_37 : f32 to vector<16x1xf32>
    %95 = arith.divf %93, %94 : vector<16x1xf32>
    %96 = vector.broadcast %95 : vector<16x1xf32> to vector<16x16xf32>
    %97 = arith.subf %89, %96 : vector<16x16xf32>
    %98 = arith.mulf %97, %97 : vector<16x16xf32>
    %cst_38 = arith.constant dense<0.000000e+00> : vector<16xf32>
    %99 = vector.multi_reduction <add>, %98, %cst_38 [1] : vector<16x16xf32> to vector<16xf32>
    %100 = vector.shape_cast %99 : vector<16xf32> to vector<16x1xf32>
    %cst_39 = arith.constant 1.600000e+01 : f32
    %101 = vector.broadcast %cst_39 : f32 to vector<16x1xf32>
    %102 = arith.divf %100, %101 : vector<16x1xf32>
    %103 = vector.broadcast %95 : vector<16x1xf32> to vector<16x16xf32>
    %104 = arith.subf %89, %103 : vector<16x16xf32>
    %cst_40 = arith.constant 9.99999974E-6 : f32
    %105 = vector.broadcast %cst_40 : f32 to vector<16x1xf32>
    %106 = arith.addf %102, %105 : vector<16x1xf32>
    %107 = math.rsqrt %106 : vector<16x1xf32>
    %108 = vector.broadcast %107 : vector<16x1xf32> to vector<16x16xf32>
    %109 = arith.mulf %104, %108 : vector<16x16xf32>
    %110 = vector.broadcast %90 : vector<1x16xf32> to vector<16x16xf32>
    %111 = arith.mulf %109, %110 : vector<16x16xf32>
    %112 = vector.broadcast %91 : vector<1x16xf32> to vector<16x16xf32>
    %113 = arith.addf %111, %112 : vector<16x16xf32>
    %c48 = arith.constant 48 : index
    %c0_41 = arith.constant 0 : index
    %114 = vector.load %arg3[%c48, %c0_41] : memref<184x48xbf16, #tpu.memory_space<vmem>>, vector<16x48xbf16>
    %115 = arith.truncf %113 : vector<16x16xf32> to vector<16x16xbf16>
    %cst_42 = arith.constant dense<0.000000e+00> : vector<16x48xf32>
    %116 = tpu.matmul %115, %114, %cst_42 {dimension_numbers = #tpu.dot_dimension_numbers<[1], [0], [0], [1], [0, 0, 1, 1], [], []>} : vector<16x16xbf16>, vector<16x48xbf16>, vector<16x48xf32> -> vector<16x48xf32>
    %c8 = arith.constant 8 : index
    %c0_43 = arith.constant 0 : index
    %117 = vector.load %arg4[%c8, %c0_43] : memref<16x48xf32, #tpu.memory_space<vmem>>, vector<1x48xf32>
    %118 = vector.broadcast %117 : vector<1x48xf32> to vector<16x48xf32>
    %119 = arith.addf %116, %118 : vector<16x48xf32>
    %120 = vector.extract_strided_slice %119 {offsets = [0, 0], sizes = [16, 16], strides = [1, 1]} : vector<16x48xf32> to vector<16x16xf32>
    %121 = vector.extract_strided_slice %119 {offsets = [0, 16], sizes = [16, 16], strides = [1, 1]} : vector<16x48xf32> to vector<16x16xf32>
    %122 = vector.extract_strided_slice %119 {offsets = [0, 32], sizes = [16, 16], strides = [1, 1]} : vector<16x48xf32> to vector<16x16xf32>
    %123 = arith.truncf %120 : vector<16x16xf32> to vector<16x16xbf16>
    %124 = arith.truncf %121 : vector<16x16xf32> to vector<16x16xbf16>
    "tpu.trace_start"() <{level = 10 : i32, message = "qd,kd->qk"}> : () -> ()
    %cst_44 = arith.constant dense<0.000000e+00> : vector<16x16xf32>
    %125 = tpu.matmul %123, %124, %cst_44 {dimension_numbers = #tpu.dot_dimension_numbers<[1], [1], [0], [0], [0, 0, 1, 0], [], []>} : vector<16x16xbf16>, vector<16x16xbf16>, vector<16x16xf32> -> vector<16x16xf32>
    "tpu.trace_stop"() : () -> ()
    %cst_45 = arith.constant -1.000000e+09 : f32
    %126 = vector.broadcast %cst_45 : f32 to vector<1x16xf32>
    %127 = arith.mulf %3, %126 : vector<1x16xf32>
    %128 = vector.broadcast %127 : vector<1x16xf32> to vector<16x16xf32>
    %129 = arith.addf %125, %128 : vector<16x16xf32>
    %cst_46 = arith.constant dense<0xFF800000> : vector<16xf32>
    %130 = vector.multi_reduction <maximumf>, %129, %cst_46 [1] : vector<16x16xf32> to vector<16xf32>
    %131 = vector.shape_cast %130 : vector<16xf32> to vector<16x1xf32>
    %132 = vector.broadcast %131 : vector<16x1xf32> to vector<16x16xf32>
    %133 = arith.subf %129, %132 : vector<16x16xf32>
    %134 = math.exp %133 : vector<16x16xf32>
    %cst_47 = arith.constant dense<0.000000e+00> : vector<16xf32>
    %135 = vector.multi_reduction <add>, %134, %cst_47 [1] : vector<16x16xf32> to vector<16xf32>
    %136 = vector.shape_cast %135 : vector<16xf32> to vector<16x1xf32>
    %137 = tpu.reciprocal %136 {approx = true} : vector<16x1xf32> -> vector<16x1xf32>
    %138 = vector.broadcast %137 : vector<16x1xf32> to vector<16x16xf32>
    %139 = arith.mulf %134, %138 : vector<16x16xf32>
    %140 = arith.truncf %139 : vector<16x16xf32> to vector<16x16xbf16>
    %141 = arith.truncf %122 : vector<16x16xf32> to vector<16x16xbf16>
    %cst_48 = arith.constant dense<0.000000e+00> : vector<16x16xf32>
    %142 = tpu.matmul %140, %141, %cst_48 {dimension_numbers = #tpu.dot_dimension_numbers<[1], [0], [0], [1], [0, 0, 1, 1], [], []>} : vector<16x16xbf16>, vector<16x16xbf16>, vector<16x16xf32> -> vector<16x16xf32>
    %c64 = arith.constant 64 : index
    %c0_49 = arith.constant 0 : index
    %143 = vector.load %arg3[%c64, %c0_49] : memref<184x48xbf16, #tpu.memory_space<vmem>>, vector<16x32xbf16>
    %144 = arith.truncf %142 : vector<16x16xf32> to vector<16x16xbf16>
    %cst_50 = arith.constant dense<0.000000e+00> : vector<16x32xf32>
    %145 = tpu.matmul %144, %143, %cst_50 {dimension_numbers = #tpu.dot_dimension_numbers<[1], [0], [0], [1], [0, 0, 1, 1], [], []>} : vector<16x16xbf16>, vector<16x32xbf16>, vector<16x32xf32> -> vector<16x32xf32>
    %c9 = arith.constant 9 : index
    %c0_51 = arith.constant 0 : index
    %146 = vector.load %arg4[%c9, %c0_51] : memref<16x48xf32, #tpu.memory_space<vmem>>, vector<1x32xf32>
    %147 = vector.broadcast %146 : vector<1x32xf32> to vector<16x32xf32>
    %148 = arith.addf %145, %147 : vector<16x32xf32>
    %149 = arith.addf %1, %148 : vector<16x32xf32>
    %c10 = arith.constant 10 : index
    %c0_52 = arith.constant 0 : index
    %150 = vector.load %arg4[%c10, %c0_52] : memref<16x48xf32, #tpu.memory_space<vmem>>, vector<1x32xf32>
    %c11 = arith.constant 11 : index
    %c0_53 = arith.constant 0 : index
    %151 = vector.load %arg4[%c11, %c0_53] : memref<16x48xf32, #tpu.memory_space<vmem>>, vector<1x32xf32>
    %cst_54 = arith.constant dense<0.000000e+00> : vector<16xf32>
    %152 = vector.multi_reduction <add>, %149, %cst_54 [1] : vector<16x32xf32> to vector<16xf32>
    %153 = vector.shape_cast %152 : vector<16xf32> to vector<16x1xf32>
    %cst_55 = arith.constant 3.200000e+01 : f32
    %154 = vector.broadcast %cst_55 : f32 to vector<16x1xf32>
    %155 = arith.divf %153, %154 : vector<16x1xf32>
    %156 = vector.broadcast %155 : vector<16x1xf32> to vector<16x32xf32>
    %157 = arith.subf %149, %156 : vector<16x32xf32>
    %158 = arith.mulf %157, %157 : vector<16x32xf32>
    %cst_56 = arith.constant dense<0.000000e+00> : vector<16xf32>
    %159 = vector.multi_reduction <add>, %158, %cst_56 [1] : vector<16x32xf32> to vector<16xf32>
    %160 = vector.shape_cast %159 : vector<16xf32> to vector<16x1xf32>
    %cst_57 = arith.constant 3.200000e+01 : f32
    %161 = vector.broadcast %cst_57 : f32 to vector<16x1xf32>
    %162 = arith.divf %160, %161 : vector<16x1xf32>
    %163 = vector.broadcast %155 : vector<16x1xf32> to vector<16x32xf32>
    %164 = arith.subf %149, %163 : vector<16x32xf32>
    %cst_58 = arith.constant 9.99999974E-6 : f32
    %165 = vector.broadcast %cst_58 : f32 to vector<16x1xf32>
    %166 = arith.addf %162, %165 : vector<16x1xf32>
    %167 = math.rsqrt %166 : vector<16x1xf32>
    %168 = vector.broadcast %167 : vector<16x1xf32> to vector<16x32xf32>
    %169 = arith.mulf %164, %168 : vector<16x32xf32>
    %170 = vector.broadcast %150 : vector<1x32xf32> to vector<16x32xf32>
    %171 = arith.mulf %169, %170 : vector<16x32xf32>
    %172 = vector.broadcast %151 : vector<1x32xf32> to vector<16x32xf32>
    %173 = arith.addf %171, %172 : vector<16x32xf32>
    %c80 = arith.constant 80 : index
    %c0_59 = arith.constant 0 : index
    %174 = vector.load %arg3[%c80, %c0_59] : memref<184x48xbf16, #tpu.memory_space<vmem>>, vector<32x8xbf16>
    %175 = arith.truncf %173 : vector<16x32xf32> to vector<16x32xbf16>
    %cst_60 = arith.constant dense<0.000000e+00> : vector<16x8xf32>
    %176 = tpu.matmul %175, %174, %cst_60 {dimension_numbers = #tpu.dot_dimension_numbers<[1], [0], [0], [1], [0, 0, 1, 1], [], []>} : vector<16x32xbf16>, vector<32x8xbf16>, vector<16x8xf32> -> vector<16x8xf32>
    %c12 = arith.constant 12 : index
    %c0_61 = arith.constant 0 : index
    %177 = vector.load %arg4[%c12, %c0_61] : memref<16x48xf32, #tpu.memory_space<vmem>>, vector<1x8xf32>
    %178 = vector.broadcast %177 : vector<1x8xf32> to vector<16x8xf32>
    %179 = arith.addf %176, %178 : vector<16x8xf32>
    %180 = arith.mulf %179, %179 : vector<16x8xf32>
    %181 = arith.mulf %179, %180 : vector<16x8xf32>
    %cst_62 = arith.constant 4.471500e-02 : f32
    %182 = vector.broadcast %cst_62 : f32 to vector<16x8xf32>
    %183 = arith.mulf %182, %181 : vector<16x8xf32>
    %184 = arith.addf %179, %183 : vector<16x8xf32>
    %cst_63 = arith.constant 0.797884583 : f32
    %185 = vector.broadcast %cst_63 : f32 to vector<16x8xf32>
    %186 = arith.mulf %185, %184 : vector<16x8xf32>
    %187 = math.tanh %186 : vector<16x8xf32>
    %cst_64 = arith.constant 1.000000e+00 : f32
    %188 = vector.broadcast %cst_64 : f32 to vector<16x8xf32>
    %189 = arith.addf %188, %187 : vector<16x8xf32>
    %cst_65 = arith.constant 5.000000e-01 : f32
    %190 = vector.broadcast %cst_65 : f32 to vector<16x8xf32>
    %191 = arith.mulf %190, %189 : vector<16x8xf32>
    %192 = arith.mulf %179, %191 : vector<16x8xf32>
    %c112 = arith.constant 112 : index
    %c0_66 = arith.constant 0 : index
    %193 = vector.load %arg3[%c112, %c0_66] : memref<184x48xbf16, #tpu.memory_space<vmem>>, vector<8x32xbf16>
    %194 = arith.truncf %192 : vector<16x8xf32> to vector<16x8xbf16>
    %cst_67 = arith.constant dense<0.000000e+00> : vector<16x32xf32>
    %195 = tpu.matmul %194, %193, %cst_67 {dimension_numbers = #tpu.dot_dimension_numbers<[1], [0], [0], [1], [0, 0, 1, 1], [], []>} : vector<16x8xbf16>, vector<8x32xbf16>, vector<16x32xf32> -> vector<16x32xf32>
    %c13 = arith.constant 13 : index
    %c0_68 = arith.constant 0 : index
    %196 = vector.load %arg4[%c13, %c0_68] : memref<16x48xf32, #tpu.memory_space<vmem>>, vector<1x32xf32>
    %197 = vector.broadcast %196 : vector<1x32xf32> to vector<16x32xf32>
    %198 = arith.addf %195, %197 : vector<16x32xf32>
    %199 = arith.addf %149, %198 : vector<16x32xf32>
    %c0_69 = arith.constant 0 : index
    %c0_70 = arith.constant 0 : index
    %c0_71 = arith.constant 0 : index
    %200 = vector.load %arg5[%c0_69, %c0_70, %c0_71] : memref<1x16x32xf32, #tpu.memory_space<vmem>>, vector<1x16x32xf32>
    %201 = vector.shape_cast %200 : vector<1x16x32xf32> to vector<16x32xf32>
    %202 = vector.shape_cast %199 : vector<16x32xf32> to vector<1x16x32xf32>
    tpu.vector_store %arg5[%c0_69, %c0_70, %c0_71], %202 {strides = array<i32>} : memref<1x16x32xf32, #tpu.memory_space<vmem>>, vector<1x16x32xf32>,
    return
  }
  func.func @transform_0(%arg0: i32) -> (i32, i32, i32) {
    %c0_i32 = arith.constant 0 : i32
    %c0_i32_0 = arith.constant 0 : i32
    %c0_i32_1 = arith.constant 0 : i32
    return %arg0, %c0_i32, %c0_i32_0 : i32, i32, i32
  }
  func.func @transform_1(%arg0: i32) -> (i32, i32, i32) {
    %c0_i32 = arith.constant 0 : i32
    %c0_i32_0 = arith.constant 0 : i32
    %c0_i32_1 = arith.constant 0 : i32
    return %arg0, %c0_i32, %c0_i32_0 : i32, i32, i32
  }
  func.func @transform_2(%arg0: i32) -> (i32, i32) {
    %c0_i32 = arith.constant 0 : i32
    %c0_i32_0 = arith.constant 0 : i32
    %c0_i32_1 = arith.constant 0 : i32
    return %c0_i32, %c0_i32_0 : i32, i32
  }
  func.func @transform_3(%arg0: i32) -> (i32, i32) {
    %c0_i32 = arith.constant 0 : i32
    %c0_i32_0 = arith.constant 0 : i32
    %c0_i32_1 = arith.constant 0 : i32
    return %c0_i32, %c0_i32_0 : i32, i32
  }
  func.func @transform_4(%arg0: i32) -> (i32, i32, i32) {
    %c0_i32 = arith.constant 0 : i32
    %c0_i32_0 = arith.constant 0 : i32
    %c0_i32_1 = arith.constant 0 : i32
    return %arg0, %c0_i32, %c0_i32_0 : i32, i32, i32
  }
}

module attributes {stable_mosaic.version = 11 : i64} {
  func.func @propagation_kernel(%arg0: i32, %arg1: memref<64x32xf32, #tpu.memory_space<vmem>>, %arg2: memref<64x1xi32, #tpu.memory_space<vmem>>, %arg3: memref<32x32xf32, #tpu.memory_space<vmem>>, %arg4: memref<184x48xbf16, #tpu.memory_space<vmem>>, %arg5: memref<16x48xf32, #tpu.memory_space<vmem>>, %arg6: memref<64x32xf32, #tpu.memory_space<vmem>>) attributes {dimension_semantics = [#tpu.dimension_semantics<parallel>], iteration_bounds = array<i64: 1>, scalar_prefetch = 0 : i64, scratch_operands = 0 : i64, tpu.core_type = #tpu.core_type<tc>, window_params = [{transform_indices = @transform_0, window_bounds = array<i64: 64, 32>}, {transform_indices = @transform_1, window_bounds = array<i64: 64, 1>}, {pipeline_mode = #tpu.pipeline_mode<synchronous>, transform_indices = @transform_2, window_bounds = array<i64: 32, 32>}, {pipeline_mode = #tpu.pipeline_mode<synchronous>, transform_indices = @transform_3, window_bounds = array<i64: 184, 48>}, {pipeline_mode = #tpu.pipeline_mode<synchronous>, transform_indices = @transform_4, window_bounds = array<i64: 16, 48>}, {transform_indices = @transform_5, window_bounds = array<i64: 64, 32>}]} {
    %c0 = arith.constant 0 : index
    %c0_0 = arith.constant 0 : index
    %0 = vector.load %arg2[%c0, %c0_0] : memref<64x1xi32, #tpu.memory_space<vmem>>, vector<64x1xi32>
    %1 = tpu.iota {dimensions = array<i32: 1>} : vector<64x32xi32>
    %2 = vector.broadcast %0 : vector<64x1xi32> to vector<64x32xi32>
    %3 = arith.cmpi eq, %1, %2 : vector<64x32xi32>
    %4 = arith.extui %3 : vector<64x32xi1> to vector<64x32xi32>
    %5 = arith.sitofp %4 : vector<64x32xi32> to vector<64x32xf32>
    %6 = arith.truncf %5 : vector<64x32xf32> to vector<64x32xbf16>
    %c0_1 = arith.constant 0 : index
    %c0_2 = arith.constant 0 : index
    %7 = vector.load %arg3[%c0_1, %c0_2] : memref<32x32xf32, #tpu.memory_space<vmem>>, vector<32x32xf32>
    %8 = arith.truncf %7 : vector<32x32xf32> to vector<32x32xbf16>
    %cst = arith.constant dense<0.000000e+00> : vector<64x32xf32>
    %9 = tpu.matmul %6, %8, %cst {dimension_numbers = #tpu.dot_dimension_numbers<[1], [0], [0], [1], [0, 0, 1, 1], [], []>} : vector<64x32xbf16>, vector<32x32xbf16>, vector<64x32xf32> -> vector<64x32xf32>
    %c0_3 = arith.constant 0 : index
    %c0_4 = arith.constant 0 : index
    %10 = vector.load %arg1[%c0_3, %c0_4] : memref<64x32xf32, #tpu.memory_space<vmem>>, vector<64x32xf32>
    %c120 = arith.constant 120 : index
    %c0_5 = arith.constant 0 : index
    %11 = vector.load %arg4[%c120, %c0_5] : memref<184x48xbf16, #tpu.memory_space<vmem>>, vector<32x32xbf16>
    %12 = arith.truncf %10 : vector<64x32xf32> to vector<64x32xbf16>
    %cst_6 = arith.constant dense<0.000000e+00> : vector<64x32xf32>
    %13 = tpu.matmul %12, %11, %cst_6 {dimension_numbers = #tpu.dot_dimension_numbers<[1], [0], [0], [1], [0, 0, 1, 1], [], []>} : vector<64x32xbf16>, vector<32x32xbf16>, vector<64x32xf32> -> vector<64x32xf32>
    %c152 = arith.constant 152 : index
    %c0_7 = arith.constant 0 : index
    %14 = vector.load %arg4[%c152, %c0_7] : memref<184x48xbf16, #tpu.memory_space<vmem>>, vector<32x32xbf16>
    %15 = arith.truncf %9 : vector<64x32xf32> to vector<64x32xbf16>
    %cst_8 = arith.constant dense<0.000000e+00> : vector<64x32xf32>
    %16 = tpu.matmul %15, %14, %cst_8 {dimension_numbers = #tpu.dot_dimension_numbers<[1], [0], [0], [1], [0, 0, 1, 1], [], []>} : vector<64x32xbf16>, vector<32x32xbf16>, vector<64x32xf32> -> vector<64x32xf32>
    %17 = arith.addf %13, %16 : vector<64x32xf32>
    %c14 = arith.constant 14 : index
    %c0_9 = arith.constant 0 : index
    %18 = vector.load %arg5[%c14, %c0_9] : memref<16x48xf32, #tpu.memory_space<vmem>>, vector<1x32xf32>
    %c15 = arith.constant 15 : index
    %c0_10 = arith.constant 0 : index
    %19 = vector.load %arg5[%c15, %c0_10] : memref<16x48xf32, #tpu.memory_space<vmem>>, vector<1x32xf32>
    %cst_11 = arith.constant dense<0.000000e+00> : vector<64xf32>
    %20 = vector.multi_reduction <add>, %17, %cst_11 [1] : vector<64x32xf32> to vector<64xf32>
    %21 = vector.shape_cast %20 : vector<64xf32> to vector<64x1xf32>
    %cst_12 = arith.constant 3.200000e+01 : f32
    %22 = vector.broadcast %cst_12 : f32 to vector<64x1xf32>
    %23 = arith.divf %21, %22 : vector<64x1xf32>
    %24 = vector.broadcast %23 : vector<64x1xf32> to vector<64x32xf32>
    %25 = arith.subf %17, %24 : vector<64x32xf32>
    %26 = arith.mulf %25, %25 : vector<64x32xf32>
    %cst_13 = arith.constant dense<0.000000e+00> : vector<64xf32>
    %27 = vector.multi_reduction <add>, %26, %cst_13 [1] : vector<64x32xf32> to vector<64xf32>
    %28 = vector.shape_cast %27 : vector<64xf32> to vector<64x1xf32>
    %cst_14 = arith.constant 3.200000e+01 : f32
    %29 = vector.broadcast %cst_14 : f32 to vector<64x1xf32>
    %30 = arith.divf %28, %29 : vector<64x1xf32>
    %31 = vector.broadcast %23 : vector<64x1xf32> to vector<64x32xf32>
    %32 = arith.subf %17, %31 : vector<64x32xf32>
    %cst_15 = arith.constant 9.99999974E-6 : f32
    %33 = vector.broadcast %cst_15 : f32 to vector<64x1xf32>
    %34 = arith.addf %30, %33 : vector<64x1xf32>
    %35 = math.rsqrt %34 : vector<64x1xf32>
    %36 = vector.broadcast %35 : vector<64x1xf32> to vector<64x32xf32>
    %37 = arith.mulf %32, %36 : vector<64x32xf32>
    %38 = vector.broadcast %18 : vector<1x32xf32> to vector<64x32xf32>
    %39 = arith.mulf %37, %38 : vector<64x32xf32>
    %40 = vector.broadcast %19 : vector<1x32xf32> to vector<64x32xf32>
    %41 = arith.addf %39, %40 : vector<64x32xf32>
    %cst_16 = arith.constant 0.000000e+00 : f32
    %42 = vector.broadcast %cst_16 : f32 to vector<64x32xf32>
    %43 = arith.maximumf %41, %42 : vector<64x32xf32>
    %c0_17 = arith.constant 0 : index
    %c0_18 = arith.constant 0 : index
    %44 = vector.load %arg6[%c0_17, %c0_18] : memref<64x32xf32, #tpu.memory_space<vmem>>, vector<64x32xf32>
    tpu.vector_store %arg6[%c0_17, %c0_18], %43 {strides = array<i32>} : memref<64x32xf32, #tpu.memory_space<vmem>>, vector<64x32xf32>,
    return
  }
  func.func @transform_0(%arg0: i32) -> (i32, i32) {
    %c0_i32 = arith.constant 0 : i32
    %c0_i32_0 = arith.constant 0 : i32
    return %arg0, %c0_i32 : i32, i32
  }
  func.func @transform_1(%arg0: i32) -> (i32, i32) {
    %c0_i32 = arith.constant 0 : i32
    %c0_i32_0 = arith.constant 0 : i32
    return %arg0, %c0_i32 : i32, i32
  }
  func.func @transform_2(%arg0: i32) -> (i32, i32) {
    %c0_i32 = arith.constant 0 : i32
    %c0_i32_0 = arith.constant 0 : i32
    %c0_i32_1 = arith.constant 0 : i32
    return %c0_i32, %c0_i32_0 : i32, i32
  }
  func.func @transform_3(%arg0: i32) -> (i32, i32) {
    %c0_i32 = arith.constant 0 : i32
    %c0_i32_0 = arith.constant 0 : i32
    %c0_i32_1 = arith.constant 0 : i32
    return %c0_i32, %c0_i32_0 : i32, i32
  }
  func.func @transform_4(%arg0: i32) -> (i32, i32) {
    %c0_i32 = arith.constant 0 : i32
    %c0_i32_0 = arith.constant 0 : i32
    %c0_i32_1 = arith.constant 0 : i32
    return %c0_i32, %c0_i32_0 : i32, i32
  }
  func.func @transform_5(%arg0: i32) -> (i32, i32) {
    %c0_i32 = arith.constant 0 : i32
    %c0_i32_0 = arith.constant 0 : i32
    return %arg0, %c0_i32 : i32, i32
  }
}

</mosaic_0001>

<llo_original>
// kernel: inter_region_transformer_encoder.3
$region0: #{inter_region_transformer_encoder.3}
  #allocation0 [shape = 'u32[]', space=smem, size = 0x4, offset = 0x4, fixed_abs, tag = 'smem constant byte address 0x4 - core index']
  #allocation1 [shape = 'u32[144,128]{1,0:T(1,128)}', space=vmem, size = 0x12000, scoped, tag = 'internal scratch']
  %s0 = inlined_call_operand.vmem [shape: f32[64,32], index: 0, kind: input, shape index: {}]
  %s1 = inlined_call_operand.vmem [shape: s32[64,1], index: 1, kind: input, shape index: {}]
  %s2 = inlined_call_operand.vmem [shape: f32[32,32], index: 2, kind: input, shape index: {}]
  %s3 = inlined_call_operand.vmem [shape: bf16[184,48], index: 3, kind: input, shape index: {}]
  %s4 = inlined_call_operand.vmem [shape: f32[16,48], index: 4, kind: input, shape index: {}]
  %s5 = inlined_call_operand.vmem [shape: f32[64,32], index: 5, kind: output, shape index: {}]
  %s6 = sld [smem:[#allocation0]]
  $region30: #{inter_region_transformer_encoder.3} parent=0
    _
  %s8 = ssub.s32 1, %s6
  %s9 = scalar_select 0, %s8, %s6
  // Predicated region
  $region2: #{inter_region_transformer_encoder.3} parent=0 // pred_check
    _
  $region3: #{inter_region_transformer_encoder.3} parent=0 // pred_check_branch
    %11 = sbr.rel (0) target = $region5
  $region4: #{inter_region_transformer_encoder.3} parent=0 // pred_region
    _
  $region5: #{inter_region_transformer_encoder.3} parent=0 // pred_fallthru
    _
  // Predicated region
  $region6: #{inter_region_transformer_encoder.3} parent=0 // pred_check
    _
  $region7: #{inter_region_transformer_encoder.3} parent=0 // pred_check_branch
    %13 = sbr.rel (0) target = $region9
  $region8: #{inter_region_transformer_encoder.3} parent=0 // pred_region
    _
  $region9: #{inter_region_transformer_encoder.3} parent=0 // pred_fallthru
    _
  // Predicated region
  $region10: #{inter_region_transformer_encoder.3} parent=0 // pred_check
    _
  $region11: #{inter_region_transformer_encoder.3} parent=0 // pred_check_branch
    %15 = sbr.rel (0) target = $region13
  $region12: #{inter_region_transformer_encoder.3} parent=0 // pred_region
    _
  $region13: #{inter_region_transformer_encoder.3} parent=0 // pred_fallthru
    _
  // Predicated region
  $region14: #{inter_region_transformer_encoder.3} parent=0 // pred_check
    _
  $region15: #{inter_region_transformer_encoder.3} parent=0 // pred_check_branch
    %17 = sbr.rel (0) target = $region17
  $region16: #{inter_region_transformer_encoder.3} parent=0 // pred_region
    _
  $region17: #{inter_region_transformer_encoder.3} parent=0 // pred_fallthru
    _
  // Predicated region
  $region18: #{inter_region_transformer_encoder.3} parent=0 // pred_check
    _
  $region19: #{inter_region_transformer_encoder.3} parent=0 // pred_check_branch
    %19 = sbr.rel (0) target = $region21
  $region20: #{inter_region_transformer_encoder.3} parent=0 // pred_region
    _
  $region21: #{inter_region_transformer_encoder.3} parent=0 // pred_fallthru
    _
  %v21 = vld [vmem:[%s1] sm:$0xff]
  %v22 = vld [vmem:[%s1 + $0x8] sm:$0xff]
  %v23 = vld [vmem:[%s1 + $0x10] sm:$0xff]
  %v24 = vld [vmem:[%s1 + $0x18] sm:$0xff]
  %v25 = vld [vmem:[%s1 + $0x20] sm:$0xff]
  %v26 = vld [vmem:[%s1 + $0x28] sm:$0xff]
  %v27 = vld [vmem:[%s1 + $0x30] sm:$0xff]
  %v28 = vld [vmem:[%s1 + $0x38] sm:$0xff]
  %v29 = vlaneseq
  %v30 = vand.u32 %v29, 127
  %31 = vset.pattern.permute.xlu0 0
  %32 = vperm.xlu0 %31, %v21
  %v33 = vpop.permute.xlu0 %32
  %34 = vset.pattern.permute.xlu0 0
  %35 = vperm.xlu0 %34, %v22
  %v36 = vpop.permute.xlu0 %35
  %37 = vset.pattern.permute.xlu0 0
  %38 = vperm.xlu0 %37, %v23
  %v39 = vpop.permute.xlu0 %38
  %40 = vset.pattern.permute.xlu0 0
  %41 = vperm.xlu0 %40, %v24
  %v42 = vpop.permute.xlu0 %41
  %43 = vset.pattern.permute.xlu0 0
  %44 = vperm.xlu0 %43, %v25
  %v45 = vpop.permute.xlu0 %44
  %46 = vset.pattern.permute.xlu0 0
  %47 = vperm.xlu0 %46, %v26
  %v48 = vpop.permute.xlu0 %47
  %49 = vset.pattern.permute.xlu0 0
  %50 = vperm.xlu0 %49, %v27
  %v51 = vpop.permute.xlu0 %50
  %52 = vset.pattern.permute.xlu0 0
  %53 = vperm.xlu0 %52, %v28
  %v54 = vpop.permute.xlu0 %53
  %vm55 = vcmp.eq.s32.totalorder %v30, %v33
  %vm56 = vcmp.eq.s32.totalorder %v30, %v36
  %vm57 = vcmp.eq.s32.totalorder %v30, %v39
  %vm58 = vcmp.eq.s32.totalorder %v30, %v42
  %vm59 = vcmp.eq.s32.totalorder %v30, %v45
  %vm60 = vcmp.eq.s32.totalorder %v30, %v48
  %vm61 = vcmp.eq.s32.totalorder %v30, %v51
  %vm62 = vcmp.eq.s32.totalorder %v30, %v54
  %v63 = vsel %vm55, 1, 0
  %v64 = vsel %vm56, 1, 0
  %v65 = vsel %vm57, 1, 0
  %v66 = vsel %vm58, 1, 0
  %v67 = vsel %vm59, 1, 0
  %v68 = vsel %vm60, 1, 0
  %v69 = vsel %vm61, 1, 0
  %v70 = vsel %vm62, 1, 0
  %v71 = vcvt.s32.f32 %v63
  %v72 = vcvt.s32.f32 %v64
  %v73 = vcvt.s32.f32 %v65
  %v74 = vcvt.s32.f32 %v66
  %v75 = vcvt.s32.f32 %v67
  %v76 = vcvt.s32.f32 %v68
  %v77 = vcvt.s32.f32 %v69
  %v78 = vcvt.s32.f32 %v70
  %v79 = vpack.c.bf16 %v72, %v71
  %v80 = vpack.c.bf16 %v74, %v73
  %v81 = vpack.c.bf16 %v76, %v75
  %v82 = vpack.c.bf16 %v78, %v77
  %v83 = vld [vmem:[%s2] sm:$0xff]
  %v84 = vld [vmem:[%s2 + $0x8] sm:$0xff]
  %v85 = vld [vmem:[%s2 + $0x10] sm:$0xff]
  %v86 = vld [vmem:[%s2 + $0x18] sm:$0xff]
  %v87 = vpack.c.bf16 %v84, %v83
  %v88 = vpack.c.bf16 %v86, %v85
  %vm89 = vcmask 261120
  %v91 = vsel %vm89, %v79, 0
  %v94 = vsel %vm89, %v80, 0
  %v97 = vsel %vm89, %v81, 0
  %v100 = vsel %vm89, %v82, 0
  %102 = vmatprep.subr.bf16.mxu0 0
  %103 = vmatpush1.bf16.msra.mxu0 0
  %104 = vmatprep.subr.bf16.mxu0 0
  %105 = vmatpush1.bf16.msra.mxu0 0
  %106 = vmatprep.subr.bf16.mxu0 0
  %107 = vmatpush1.bf16.msra.mxu0 0
  %108 = vmatprep.subr.bf16.mxu0 0
  %109 = vmatpush1.bf16.msra.mxu0 0
  %110 = vmatprep.subr.bf16.mxu0 0
  %111 = vmatpush1.bf16.msra.mxu0 0
  %112 = vmatprep.subr.bf16.mxu0 0
  %113 = vmatpush1.bf16.msra.mxu0 0
  %114 = vmatprep.subr.bf16.mxu0 0
  %115 = vmatpush1.bf16.msra.mxu0 %v88
  %116 = vmatprep.subr.bf16.mxu0 0
  %117 = vmatpush1.bf16.msra.mxu0 %v87
  %118 = vmatprep.subr.bf16.mxu0 0
  %119 = vmatpush2.bf16.msra.mxu0 0
  %120 = vmatprep.subr.bf16.mxu0 0
  %121 = vmatpush2.bf16.msra.mxu0 0
  %122 = vmatprep.subr.bf16.mxu0 0
  %123 = vmatpush2.bf16.msra.mxu0 0
  %124 = vmatprep.subr.bf16.mxu0 0
  %125 = vmatpush2.bf16.msra.mxu0 0
  %126 = vmatprep.subr.bf16.mxu0 0
  %127 = vmatpush2.bf16.msra.mxu0 0
  %128 = vmatprep.subr.bf16.mxu0 0
  %129 = vmatpush2.bf16.msra.mxu0 0
  %130 = vmatprep.subr.bf16.mxu0 0
  %131 = vmatpush2.bf16.msra.mxu0 0
  %132 = vmatprep.subr.bf16.mxu0 0
  %133 = vmatpush2.bf16.msra.mxu0 0
  %134 = vmatprep.mubr.bf16.mxu0 0
  %135 = vmatmul.mubr.bf16.gmra.mxu0 %v91
  %v136 = vpop.f32.mrf.mxu0
  %v137 = vadd.f32 0.0, %v136
  %v138 = vpop.f32.mrf.mxu0
  %v139 = vpop.f32.mrf.mxu0
  %v140 = vadd.f32 0.0, %v139
  %v141 = vpop.f32.mrf.mxu0
  %142 = vmatprep.mubr.bf16.mxu0 0
  %143 = vmatmul.mubr.bf16.gmra.mxu0 %v94
  %v144 = vpop.f32.mrf.mxu0
  %v145 = vadd.f32 0.0, %v144
  %v146 = vpop.f32.mrf.mxu0
  %v147 = vpop.f32.mrf.mxu0
  %v148 = vadd.f32 0.0, %v147
  %v149 = vpop.f32.mrf.mxu0
  %150 = vmatprep.mubr.bf16.mxu0 0
  %151 = vmatmul.mubr.bf16.gmra.mxu0 %v97
  %v152 = vpop.f32.mrf.mxu0
  %v153 = vadd.f32 0.0, %v152
  %v154 = vpop.f32.mrf.mxu0
  %v155 = vpop.f32.mrf.mxu0
  %v156 = vadd.f32 0.0, %v155
  %v157 = vpop.f32.mrf.mxu0
  %158 = vmatprep.mubr.bf16.mxu0 0
  %159 = vmatmul.mubr.bf16.gmra.mxu0 %v100
  %v160 = vpop.f32.mrf.mxu0
  %v161 = vadd.f32 0.0, %v160
  %v162 = vpop.f32.mrf.mxu0
  %v163 = vpop.f32.mrf.mxu0
  %v164 = vadd.f32 0.0, %v163
  %v165 = vpop.f32.mrf.mxu0
  %166 = vdwg.mxu0
  %v167 = vld [vmem:[%s0] sm:$0xff]
  %v168 = vld [vmem:[%s0 + $0x8] sm:$0xff]
  %v169 = vld [vmem:[%s0 + $0x10] sm:$0xff]
  %v170 = vld [vmem:[%s0 + $0x18] sm:$0xff]
  %v171 = vld [vmem:[%s0 + $0x20] sm:$0xff]
  %v172 = vld [vmem:[%s0 + $0x28] sm:$0xff]
  %v173 = vld [vmem:[%s0 + $0x30] sm:$0xff]
  %v174 = vld [vmem:[%s0 + $0x38] sm:$0xff]
  %v175 = vld [vmem:[%s3 + $0x3c] sm:$0xf]
  %v176 = vld [vmem:[%s3 + $0x40] sm:$0xf]
  %v177 = vld [vmem:[%s3 + $0x44] sm:$0xf]
  %v178 = vld [vmem:[%s3 + $0x48] sm:$0xf]
  %v179 = vpack.c.bf16 %v168, %v167
  %v180 = vpack.c.bf16 %v170, %v169
  %v181 = vpack.c.bf16 %v172, %v171
  %v182 = vpack.c.bf16 %v174, %v173
  %v183 = vld [vmem:[%s3 + $0x4c] sm:$0xf]
  %v184 = vld [vmem:[%s3 + $0x50] sm:$0xf]
  %v185 = vld [vmem:[%s3 + $0x54] sm:$0xf]
  %v186 = vld [vmem:[%s3 + $0x58] sm:$0xf]
  %v187 = vpack.c.bf16 %v140, %v137
  %v188 = vpack.c.bf16 %v148, %v145
  %v189 = vpack.c.bf16 %v156, %v153
  %v190 = vpack.c.bf16 %v164, %v161
  %v195 = vunpack.c.l.b16 %v183
  %v196 = vunpack.c.l.b16 %v184
  %v197 = vunpack.c.l.b16 %v185
  %v198 = vunpack.c.l.b16 %v186
  %v199 = vpack.c.b16 %v196, %v195
  %v200 = vpack.c.b16 %v198, %v197
  %v204 = vsel %vm89, %v187, 0
  %v207 = vsel %vm89, %v188, 0
  %v210 = vsel %vm89, %v189, 0
  %v213 = vsel %vm89, %v190, 0
  %215 = vmatprep.subr.bf16.mxu0 0
  %216 = vmatpush1.bf16.msra.mxu0 0
  %217 = vmatprep.subr.bf16.mxu0 0
  %218 = vmatpush1.bf16.msra.mxu0 0
  %219 = vmatprep.subr.bf16.mxu0 0
  %220 = vmatpush1.bf16.msra.mxu0 0
  %221 = vmatprep.subr.bf16.mxu0 0
  %222 = vmatpush1.bf16.msra.mxu0 0
  %223 = vmatprep.subr.bf16.mxu0 0
  %224 = vmatpush1.bf16.msra.mxu0 0
  %225 = vmatprep.subr.bf16.mxu0 0
  %226 = vmatpush1.bf16.msra.mxu0 0
  %227 = vmatprep.subr.bf16.mxu0 0
  %228 = vmatpush1.bf16.msra.mxu0 %v200
  %229 = vmatprep.subr.bf16.mxu0 0
  %230 = vmatpush1.bf16.msra.mxu0 %v199
  %231 = vmatprep.subr.bf16.mxu0 0
  %232 = vmatpush2.bf16.msra.mxu0 0
  %233 = vmatprep.subr.bf16.mxu0 0
  %234 = vmatpush2.bf16.msra.mxu0 0
  %235 = vmatprep.subr.bf16.mxu0 0
  %236 = vmatpush2.bf16.msra.mxu0 0
  %237 = vmatprep.subr.bf16.mxu0 0
  %238 = vmatpush2.bf16.msra.mxu0 0
  %239 = vmatprep.subr.bf16.mxu0 0
  %240 = vmatpush2.bf16.msra.mxu0 0
  %241 = vmatprep.subr.bf16.mxu0 0
  %242 = vmatpush2.bf16.msra.mxu0 0
  %243 = vmatprep.subr.bf16.mxu0 0
  %244 = vmatpush2.bf16.msra.mxu0 0
  %245 = vmatprep.subr.bf16.mxu0 0
  %246 = vmatpush2.bf16.msra.mxu0 0
  %247 = vmatprep.mubr.bf16.mxu0 0
  %248 = vmatmul.mubr.bf16.gmra.mxu0 %v204
  %v249 = vpop.f32.mrf.mxu0
  %v250 = vadd.f32 0.0, %v249
  %v251 = vpop.f32.mrf.mxu0
  %v252 = vpop.f32.mrf.mxu0
  %v253 = vadd.f32 0.0, %v252
  %v254 = vpop.f32.mrf.mxu0
  %255 = vmatprep.mubr.bf16.mxu0 0
  %256 = vmatmul.mubr.bf16.gmra.mxu0 %v207
  %v257 = vpop.f32.mrf.mxu0
  %v258 = vadd.f32 0.0, %v257
  %v259 = vpop.f32.mrf.mxu0
  %v260 = vpop.f32.mrf.mxu0
  %v261 = vadd.f32 0.0, %v260
  %v262 = vpop.f32.mrf.mxu0
  %263 = vmatprep.mubr.bf16.mxu0 0
  %264 = vmatmul.mubr.bf16.gmra.mxu0 %v210
  %v265 = vpop.f32.mrf.mxu0
  %v266 = vadd.f32 0.0, %v265
  %v267 = vpop.f32.mrf.mxu0
  %v268 = vpop.f32.mrf.mxu0
  %v269 = vadd.f32 0.0, %v268
  %v270 = vpop.f32.mrf.mxu0
  %271 = vmatprep.mubr.bf16.mxu0 0
  %272 = vmatmul.mubr.bf16.gmra.mxu0 %v213
  %v273 = vpop.f32.mrf.mxu0
  %v274 = vadd.f32 0.0, %v273
  %v275 = vpop.f32.mrf.mxu0
  %v276 = vpop.f32.mrf.mxu0
  %v277 = vadd.f32 0.0, %v276
  %v278 = vpop.f32.mrf.mxu0
  %279 = vdwg.mxu0
  %v284 = vunpack.c.l.b16 %v175
  %v285 = vunpack.c.l.b16 %v176
  %v286 = vunpack.c.l.b16 %v177
  %v287 = vunpack.c.l.b16 %v178
  %v288 = vpack.c.b16 %v285, %v284
  %v289 = vpack.c.b16 %v287, %v286
  %v293 = vsel %vm89, %v179, 0
  %v296 = vsel %vm89, %v180, 0
  %v299 = vsel %vm89, %v181, 0
  %v302 = vsel %vm89, %v182, 0
  %304 = vmatprep.subr.bf16.mxu0 0
  %305 = vmatpush1.bf16.msra.mxu0 0
  %306 = vmatprep.subr.bf16.mxu0 0
  %307 = vmatpush1.bf16.msra.mxu0 0
  %308 = vmatprep.subr.bf16.mxu0 0
  %309 = vmatpush1.bf16.msra.mxu0 0
  %310 = vmatprep.subr.bf16.mxu0 0
  %311 = vmatpush1.bf16.msra.mxu0 0
  %312 = vmatprep.subr.bf16.mxu0 0
  %313 = vmatpush1.bf16.msra.mxu0 0
  %314 = vmatprep.subr.bf16.mxu0 0
  %315 = vmatpush1.bf16.msra.mxu0 0
  %316 = vmatprep.subr.bf16.mxu0 0
  %317 = vmatpush1.bf16.msra.mxu0 %v289
  %318 = vmatprep.subr.bf16.mxu0 0
  %319 = vmatpush1.bf16.msra.mxu0 %v288
  %320 = vmatprep.subr.bf16.mxu0 0
  %321 = vmatpush2.bf16.msra.mxu0 0
  %322 = vmatprep.subr.bf16.mxu0 0
  %323 = vmatpush2.bf16.msra.mxu0 0
  %324 = vmatprep.subr.bf16.mxu0 0
  %325 = vmatpush2.bf16.msra.mxu0 0
  %326 = vmatprep.subr.bf16.mxu0 0
  %327 = vmatpush2.bf16.msra.mxu0 0
  %328 = vmatprep.subr.bf16.mxu0 0
  %329 = vmatpush2.bf16.msra.mxu0 0
  %330 = vmatprep.subr.bf16.mxu0 0
  %331 = vmatpush2.bf16.msra.mxu0 0
  %332 = vmatprep.subr.bf16.mxu0 0
  %333 = vmatpush2.bf16.msra.mxu0 0
  %334 = vmatprep.subr.bf16.mxu0 0
  %335 = vmatpush2.bf16.msra.mxu0 0
  %336 = vmatprep.mubr.bf16.mxu0 0
  %337 = vmatmul.mubr.bf16.gmra.mxu0 %v293
  %v338 = vpop.f32.mrf.mxu0
  %v339 = vadd.f32 %v250, %v338
  %v340 = vpop.f32.mrf.mxu0
  %v341 = vpop.f32.mrf.mxu0
  %v342 = vadd.f32 %v253, %v341
  %v343 = vpop.f32.mrf.mxu0
  %344 = vmatprep.mubr.bf16.mxu0 0
  %345 = vmatmul.mubr.bf16.gmra.mxu0 %v296
  %v346 = vpop.f32.mrf.mxu0
  %v347 = vadd.f32 %v258, %v346
  %v348 = vpop.f32.mrf.mxu0
  %v349 = vpop.f32.mrf.mxu0
  %v350 = vadd.f32 %v261, %v349
  %v351 = vpop.f32.mrf.mxu0
  %352 = vmatprep.mubr.bf16.mxu0 0
  %353 = vmatmul.mubr.bf16.gmra.mxu0 %v299
  %v354 = vpop.f32.mrf.mxu0
  %v355 = vadd.f32 %v266, %v354
  %v356 = vpop.f32.mrf.mxu0
  %v357 = vpop.f32.mrf.mxu0
  %v358 = vadd.f32 %v269, %v357
  %v359 = vpop.f32.mrf.mxu0
  %360 = vmatprep.mubr.bf16.mxu0 0
  %361 = vmatmul.mubr.bf16.gmra.mxu0 %v302
  %v362 = vpop.f32.mrf.mxu0
  %v363 = vadd.f32 %v274, %v362
  %v364 = vpop.f32.mrf.mxu0
  %v365 = vpop.f32.mrf.mxu0
  %v366 = vadd.f32 %v277, %v365
  %v367 = vpop.f32.mrf.mxu0
  %368 = vdwg.mxu0
  %v369 = vld [vmem:[%s4 + $0xe] sm:$0x1]
  %v370 = vld [vmem:[%s4 + $0xf] sm:$0x1]
  %v371 = vsel %vm89, %v339, 0.0
  %372 = vadd.xlane.f32.xlu0 %v371
  %v373 = vpop.xlane.xlu0 %372
  %v374 = vsel %vm89, %v342, 0.0
  %375 = vadd.xlane.f32.xlu0 %v374
  %v376 = vpop.xlane.xlu0 %375
  %v377 = vsel %vm89, %v347, 0.0
  %378 = vadd.xlane.f32.xlu0 %v377
  %v379 = vpop.xlane.xlu0 %378
  %v380 = vsel %vm89, %v350, 0.0
  %381 = vadd.xlane.f32.xlu0 %v380
  %v382 = vpop.xlane.xlu0 %381
  %v383 = vsel %vm89, %v355, 0.0
  %384 = vadd.xlane.f32.xlu0 %v383
  %v385 = vpop.xlane.xlu0 %384
  %v386 = vsel %vm89, %v358, 0.0
  %387 = vadd.xlane.f32.xlu0 %v386
  %v388 = vpop.xlane.xlu0 %387
  %v389 = vsel %vm89, %v363, 0.0
  %390 = vadd.xlane.f32.xlu0 %v389
  %v391 = vpop.xlane.xlu0 %390
  %v392 = vsel %vm89, %v366, 0.0
  %393 = vadd.xlane.f32.xlu0 %v392
  %v394 = vpop.xlane.xlu0 %393
  %v395 = vrcp.pop 32.0
  %v396 = vmul.f32 %v373, %v395
  %v397 = vmul.f32 %v376, %v395
  %v398 = vmul.f32 %v379, %v395
  %v399 = vmul.f32 %v382, %v395
  %v400 = vmul.f32 %v385, %v395
  %v401 = vmul.f32 %v388, %v395
  %v402 = vmul.f32 %v391, %v395
  %v403 = vmul.f32 %v394, %v395
  %v404 = vsub.f32 %v339, %v396
  %v405 = vsub.f32 %v342, %v397
  %v406 = vsub.f32 %v347, %v398
  %v407 = vsub.f32 %v350, %v399
  %v408 = vsub.f32 %v355, %v400
  %v409 = vsub.f32 %v358, %v401
  %v410 = vsub.f32 %v363, %v402
  %v411 = vsub.f32 %v366, %v403
  %v412 = vmul.f32 %v404, %v404
  %v413 = vmul.f32 %v405, %v405
  %v414 = vmul.f32 %v406, %v406
  %v415 = vmul.f32 %v407, %v407
  %v416 = vmul.f32 %v408, %v408
  %v417 = vmul.f32 %v409, %v409
  %v418 = vmul.f32 %v410, %v410
  %v419 = vmul.f32 %v411, %v411
  %v420 = vsel %vm89, %v412, 0.0
  %421 = vadd.xlane.f32.xlu0 %v420
  %v422 = vpop.xlane.xlu0 %421
  %v423 = vsel %vm89, %v413, 0.0
  %424 = vadd.xlane.f32.xlu0 %v423
  %v425 = vpop.xlane.xlu0 %424
  %v426 = vsel %vm89, %v414, 0.0
  %427 = vadd.xlane.f32.xlu0 %v426
  %v428 = vpop.xlane.xlu0 %427
  %v429 = vsel %vm89, %v415, 0.0
  %430 = vadd.xlane.f32.xlu0 %v429
  %v431 = vpop.xlane.xlu0 %430
  %v432 = vsel %vm89, %v416, 0.0
  %433 = vadd.xlane.f32.xlu0 %v432
  %v434 = vpop.xlane.xlu0 %433
  %v435 = vsel %vm89, %v417, 0.0
  %436 = vadd.xlane.f32.xlu0 %v435
  %v437 = vpop.xlane.xlu0 %436
  %v438 = vsel %vm89, %v418, 0.0
  %439 = vadd.xlane.f32.xlu0 %v438
  %v440 = vpop.xlane.xlu0 %439
  %v441 = vsel %vm89, %v419, 0.0
  %442 = vadd.xlane.f32.xlu0 %v441
  %v443 = vpop.xlane.xlu0 %442
  %v444 = vmul.f32 %v422, %v395
  %v445 = vmul.f32 %v425, %v395
  %v446 = vmul.f32 %v428, %v395
  %v447 = vmul.f32 %v431, %v395
  %v448 = vmul.f32 %v434, %v395
  %v449 = vmul.f32 %v437, %v395
  %v450 = vmul.f32 %v440, %v395
  %v451 = vmul.f32 %v443, %v395
  %v452 = vadd.f32 %v444, 1e-05
  %v453 = vadd.f32 %v445, 1e-05
  %v454 = vadd.f32 %v446, 1e-05
  %v455 = vadd.f32 %v447, 1e-05
  %v456 = vadd.f32 %v448, 1e-05
  %v457 = vadd.f32 %v449, 1e-05
  %v458 = vadd.f32 %v450, 1e-05
  %v459 = vadd.f32 %v451, 1e-05
  %v460 = vrsqrt.pop %v452
  %v461 = vrsqrt.pop %v453
  %v462 = vrsqrt.pop %v454
  %v463 = vrsqrt.pop %v455
  %v464 = vrsqrt.pop %v456
  %v465 = vrsqrt.pop %v457
  %v466 = vrsqrt.pop %v458
  %v467 = vrsqrt.pop %v459
  %v468 = vmul.f32 %v404, %v460
  %v469 = vmul.f32 %v405, %v461
  %v470 = vmul.f32 %v406, %v462
  %v471 = vmul.f32 %v407, %v463
  %v472 = vmul.f32 %v408, %v464
  %v473 = vmul.f32 %v409, %v465
  %v474 = vmul.f32 %v410, %v466
  %v475 = vmul.f32 %v411, %v467
  %v476 = vlaneseq
  %v477 = vshrl.u32 %v476, 7
  %v478 = vsub.s32 0, %v477
  %v479 = vrot.slane %v369, %v478
  %v480 = vmul.f32 %v468, %v479
  %v481 = vmul.f32 %v469, %v479
  %v482 = vmul.f32 %v470, %v479
  %v483 = vmul.f32 %v471, %v479
  %v484 = vmul.f32 %v472, %v479
  %v485 = vmul.f32 %v473, %v479
  %v486 = vmul.f32 %v474, %v479
  %v487 = vmul.f32 %v475, %v479
  %v488 = vlaneseq
  %v489 = vshrl.u32 %v488, 7
  %v490 = vsub.s32 0, %v489
  %v491 = vrot.slane %v370, %v490
  %v492 = vadd.f32 %v480, %v491
  %v493 = vadd.f32 %v481, %v491
  %v494 = vadd.f32 %v482, %v491
  %v495 = vadd.f32 %v483, %v491
  %v496 = vadd.f32 %v484, %v491
  %v497 = vadd.f32 %v485, %v491
  %v498 = vadd.f32 %v486, %v491
  %v499 = vadd.f32 %v487, %v491
  %v500 = vmax.f32 %v492, 0.0
  %v501 = vmax.f32 %v493, 0.0
  %v502 = vmax.f32 %v494, 0.0
  %v503 = vmax.f32 %v495, 0.0
  %v504 = vmax.f32 %v496, 0.0
  %v505 = vmax.f32 %v497, 0.0
  %v506 = vmax.f32 %v498, 0.0
  %v507 = vmax.f32 %v499, 0.0
  %508 = vst.msk [vmem:[%s5] sm:$0xff] %vm89, %v500
  %509 = vst.msk [vmem:[%s5 + $0x8] sm:$0xff] %vm89, %v501
  %510 = vst.msk [vmem:[%s5 + $0x10] sm:$0xff] %vm89, %v502
  %511 = vst.msk [vmem:[%s5 + $0x18] sm:$0xff] %vm89, %v503
  %512 = vst.msk [vmem:[%s5 + $0x20] sm:$0xff] %vm89, %v504
  %513 = vst.msk [vmem:[%s5 + $0x28] sm:$0xff] %vm89, %v505
  %514 = vst.msk [vmem:[%s5 + $0x30] sm:$0xff] %vm89, %v506
  %515 = vst.msk [vmem:[%s5 + $0x38] sm:$0xff] %vm89, %v507
  // Predicated region
  $region22: #{inter_region_transformer_encoder.3} parent=0 // pred_check
    _
  $region23: #{inter_region_transformer_encoder.3} parent=0 // pred_check_branch
    %517 = sbr.rel (0) target = $region25
  $region24: #{inter_region_transformer_encoder.3} parent=0 // pred_region
    _
  $region25: #{inter_region_transformer_encoder.3} parent=0 // pred_fallthru
    _
  // Predicated region
  $region26: #{inter_region_transformer_encoder.3} parent=0 // pred_check
    _
  $region27: #{inter_region_transformer_encoder.3} parent=0 // pred_check_branch
    %519 = sbr.rel (0) target = $region29
  $region28: #{inter_region_transformer_encoder.3} parent=0 // pred_region
    _
  $region29: #{inter_region_transformer_encoder.3} parent=0 // pred_fallthru
    _

// kernel: inter_region_transformer_encoder.2
$region0: #{inter_region_transformer_encoder.2}
  #allocation0 [shape = 'u32[]', space=smem, size = 0x4, offset = 0x4, fixed_abs, tag = 'smem constant byte address 0x4 - core index']
  #allocation1 [shape = 'u32[144,128]{1,0:T(1,128)}', space=vmem, size = 0x12000, scoped, tag = 'internal scratch']
  %s0 = inlined_call_operand.vmem [shape: f32[2,16,32], index: 0, kind: input, shape index: {}]
  %s1 = inlined_call_operand.vmem [shape: f32[2,1,16], index: 1, kind: input, shape index: {}]
  %s2 = inlined_call_operand.vmem [shape: bf16[184,48], index: 2, kind: input, shape index: {}]
  %s3 = inlined_call_operand.vmem [shape: f32[16,48], index: 3, kind: input, shape index: {}]
  %s4 = inlined_call_operand.vmem [shape: f32[2,16,32], index: 4, kind: output, shape index: {}]
  %s5 = sld [smem:[#allocation0]]
  $region49: #{inter_region_transformer_encoder.2} parent=0
    _
  %s7 = ssub.s32 1, %s5
  %s8 = scalar_select 0, %s7, %s5
  loop: start=0, step=1, limit=4
  $region2: #{inter_region_transformer_encoder.2} parent=0 // loop_pre_header
    _
  $region3: #{inter_region_transformer_encoder.2} parent=0 // loop_header
    %s10 = sphi 0, %s14
    %p11 = scmp.ge.s32.totalorder %s10, 4
    %s20 = sphi 0, %s22
    %s23 = sphi 0, %s20
    %s24 = sphi 0, %s23
    %s40 = sphi 0, %s24
    %s46 = sphi 0, %s48
    %s49 = sphi 0, %s46
    %s50 = sphi 0, %s49
    %s66 = sphi 0, %s50
    %s70 = sphi 0, %s70
    %s72 = sphi 0, %s70
    %s73 = sphi 0, %s72
    %s87 = sphi 0, %s73
    %s91 = sphi 0, %s91
    %s93 = sphi 0, %s91
    %s94 = sphi 0, %s93
    %s108 = sphi 0, %s94
    %s114 = sphi 0, %s116
    %s117 = sphi 0, %s114
    %s118 = sphi 0, %s117
    %s134 = sphi 0, %s118
  $region4: #{inter_region_transformer_encoder.2} parent=0 // loop_header_branch
    %13 = sbr.rel (%p11) target = $region8
  $region5: #{inter_region_transformer_encoder.2} parent=0 // loop_body
    %s15 = ssub.s32 %s10, 1
    %s16 = ssub.s32 %s10, 2
    %s17 = sadd.s32 %s10, 1
    %s18 = ssub.s32 %s10, %s17
    %p19 = scmp.eq.s32.totalorder %s18, 0
    %s21 = sadd.s32 %s20, 1
    %s22 = scalar_select %p19, %s20, %s21
    %p25 = pneg %p19
    %p26 = scmp.eq.s32.totalorder %s10, 1
    %p27 = por %p25, %p26
    %p28 = scmp.ne.s32.totalorder %s20, %s23
    %p29 = scmp.eq.s32.totalorder %s10, 0
    %p30 = por %p28, %p29
    %p31 = scmp.ne.s32.totalorder %s20, %s23
    %p32 = scmp.eq.s32.totalorder %s15, 1
    %p33 = por %p31, %p32
    %p34 = scmp.ne.s32.totalorder %s23, %s24
    %p35 = scmp.eq.s32.totalorder %s15, 0
    %p36 = por %p34, %p35
    %p37 = scmp.ne.s32.totalorder %s23, %s24
    %p38 = scmp.eq.s32.totalorder %s16, 1
    %p39 = por %p37, %p38
    %p41 = scmp.ne.s32.totalorder %s24, %s40
    %p42 = scmp.eq.s32.totalorder %s16, 0
    %p43 = por %p41, %p42
    %s44 = ssub.s32 %s10, %s17
    %p45 = scmp.eq.s32.totalorder %s44, 0
    %s47 = sadd.s32 %s46, 1
    %s48 = scalar_select %p45, %s46, %s47
    %p51 = pneg %p45
    %p52 = scmp.eq.s32.totalorder %s10, 1
    %p53 = por %p51, %p52
    %p54 = scmp.ne.s32.totalorder %s46, %s49
    %p55 = scmp.eq.s32.totalorder %s10, 0
    %p56 = por %p54, %p55
    %p57 = scmp.ne.s32.totalorder %s46, %s49
    %p58 = scmp.eq.s32.totalorder %s15, 1
    %p59 = por %p57, %p58
    %p60 = scmp.ne.s32.totalorder %s49, %s50
    %p61 = scmp.eq.s32.totalorder %s15, 0
    %p62 = por %p60, %p61
    %p63 = scmp.ne.s32.totalorder %s49, %s50
    %p64 = scmp.eq.s32.totalorder %s16, 1
    %p65 = por %p63, %p64
    %p67 = scmp.ne.s32.totalorder %s50, %s66
    %p68 = scmp.eq.s32.totalorder %s16, 0
    %p69 = por %p67, %p68
    %s71 = sadd.s32 %s70, 1
    %p74 = scmp.eq.s32.totalorder %s10, 1
    %p75 = scmp.ne.s32.totalorder %s70, %s72
    %p76 = scmp.eq.s32.totalorder %s10, 0
    %p77 = por %p75, %p76
    %p78 = scmp.ne.s32.totalorder %s70, %s72
    %p79 = scmp.eq.s32.totalorder %s15, 1
    %p80 = por %p78, %p79
    %p81 = scmp.ne.s32.totalorder %s72, %s73
    %p82 = scmp.eq.s32.totalorder %s15, 0
    %p83 = por %p81, %p82
    %p84 = scmp.ne.s32.totalorder %s72, %s73
    %p85 = scmp.eq.s32.totalorder %s16, 1
    %p86 = por %p84, %p85
    %p88 = scmp.ne.s32.totalorder %s73, %s87
    %p89 = scmp.eq.s32.totalorder %s16, 0
    %p90 = por %p88, %p89
    %s92 = sadd.s32 %s91, 1
    %p95 = scmp.eq.s32.totalorder %s10, 1
    %p96 = scmp.ne.s32.totalorder %s91, %s93
    %p97 = scmp.eq.s32.totalorder %s10, 0
    %p98 = por %p96, %p97
    %p99 = scmp.ne.s32.totalorder %s91, %s93
    %p100 = scmp.eq.s32.totalorder %s15, 1
    %p101 = por %p99, %p100
    %p102 = scmp.ne.s32.totalorder %s93, %s94
    %p103 = scmp.eq.s32.totalorder %s15, 0
    %p104 = por %p102, %p103
    %p105 = scmp.ne.s32.totalorder %s93, %s94
    %p106 = scmp.eq.s32.totalorder %s16, 1
    %p107 = por %p105, %p106
    %p109 = scmp.ne.s32.totalorder %s94, %s108
    %p110 = scmp.eq.s32.totalorder %s16, 0
    %p111 = por %p109, %p110
    %s112 = ssub.s32 %s10, %s17
    %p113 = scmp.eq.s32.totalorder %s112, 0
    %s115 = sadd.s32 %s114, 1
    %s116 = scalar_select %p113, %s114, %s115
    %p119 = pneg %p113
    %p120 = scmp.eq.s32.totalorder %s10, 1
    %p121 = por %p119, %p120
    %p122 = scmp.ne.s32.totalorder %s114, %s117
    %p123 = scmp.eq.s32.totalorder %s10, 0
    %p124 = por %p122, %p123
    %p125 = scmp.ne.s32.totalorder %s114, %s117
    %p126 = scmp.eq.s32.totalorder %s15, 1
    %p127 = por %p125, %p126
    %p128 = scmp.ne.s32.totalorder %s117, %s118
    %p129 = scmp.eq.s32.totalorder %s15, 0
    %p130 = por %p128, %p129
    %p131 = scmp.ne.s32.totalorder %s117, %s118
    %p132 = scmp.eq.s32.totalorder %s16, 1
    %p133 = por %p131, %p132
    %p135 = scmp.ne.s32.totalorder %s118, %s134
    %p136 = scmp.eq.s32.totalorder %s16, 0
    %p137 = por %p135, %p136
    %p138 = scmp.le.s32.totalorder 1, %s10
    %p139 = scmp.lt.s32.totalorder %s10, 3
    %p140 = pnand %p138, %p139
    %p141 = pneg %p140
    // Predicated region
    $region9: #{inter_region_transformer_encoder.2} parent=5 // pred_check
      _
    $region10: #{inter_region_transformer_encoder.2} parent=5 // pred_check_branch
      %143 = sbr.rel (%p140) target = $region12
    $region11: #{inter_region_transformer_encoder.2} parent=5 // pred_region
      %s144 = ssub.s32 %s10, 1
      // Predicated region
      $region13: #{inter_region_transformer_encoder.2} parent=11 // pred_check
        %p145 = pneg %p83
      $region14: #{inter_region_transformer_encoder.2} parent=11 // pred_check_branch
        %147 = sbr.rel (%p145) target = $region16
      $region15: #{inter_region_transformer_encoder.2} parent=11 // pred_region
        _
      $region16: #{inter_region_transformer_encoder.2} parent=11 // pred_fallthru
        _
      // Predicated region
      $region17: #{inter_region_transformer_encoder.2} parent=11 // pred_check
        %p148 = pneg %p104
      $region18: #{inter_region_transformer_encoder.2} parent=11 // pred_check_branch
        %150 = sbr.rel (%p148) target = $region20
      $region19: #{inter_region_transformer_encoder.2} parent=11 // pred_region
        _
      $region20: #{inter_region_transformer_encoder.2} parent=11 // pred_fallthru
        _
    $region12: #{inter_region_transformer_encoder.2} parent=5 // pred_fallthru
      _
    %p151 = scmp.lt.s32.totalorder %s10, 2
    // Predicated region
    $region21: #{inter_region_transformer_encoder.2} parent=5 // pred_check
      %p152 = pneg %p151
    $region22: #{inter_region_transformer_encoder.2} parent=5 // pred_check_branch
      %154 = sbr.rel (%p152) target = $region24
    $region23: #{inter_region_transformer_encoder.2} parent=5 // pred_region
      // Predicated region
      $region25: #{inter_region_transformer_encoder.2} parent=23 // pred_check
        %p155 = pneg %p30
      $region26: #{inter_region_transformer_encoder.2} parent=23 // pred_check_branch
        %157 = sbr.rel (%p155) target = $region28
      $region27: #{inter_region_transformer_encoder.2} parent=23 // pred_region
        %p158 = scmp.lt.s32.totalorder %s10, 1
        %s159 = scalar_select %p158, %s10, 1
        %s160 = smul.addr %s159, 2
        %s161 = smul.addr %s160, 8
        %s162 = scalar_lea.vmem %s0, %s161
      $region28: #{inter_region_transformer_encoder.2} parent=23 // pred_fallthru
        _
      // Predicated region
      $region29: #{inter_region_transformer_encoder.2} parent=23 // pred_check
        %p163 = pneg %p56
      $region30: #{inter_region_transformer_encoder.2} parent=23 // pred_check_branch
        %165 = sbr.rel (%p163) target = $region32
      $region31: #{inter_region_transformer_encoder.2} parent=23 // pred_region
        %p166 = scmp.lt.s32.totalorder %s10, 1
        %s167 = scalar_select %p166, %s10, 1
        %s168 = scalar_lea.vmem %s1, %s167
      $region32: #{inter_region_transformer_encoder.2} parent=23 // pred_fallthru
        _
    $region24: #{inter_region_transformer_encoder.2} parent=5 // pred_fallthru
      _
    %p169 = scmp.le.s32.totalorder 1, %s10
    %p170 = scmp.lt.s32.totalorder %s10, 3
    %p171 = pnand %p169, %p170
    %p172 = pneg %p171
    // Predicated region
    $region33: #{inter_region_transformer_encoder.2} parent=5 // pred_check
      _
    $region34: #{inter_region_transformer_encoder.2} parent=5 // pred_check_branch
      %174 = sbr.rel (%p171) target = $region36
    $region35: #{inter_region_transformer_encoder.2} parent=5 // pred_region
      %s175 = ssub.s32 %s10, 1
      %p176 = scmp.lt.s32.totalorder %s15, 1
      %s177 = scalar_select %p176, %s15, 1
      %s178 = smul.addr %s177, 2
      %s179 = smul.addr %s178, 8
      %s180 = scalar_lea.vmem %s0, %s179
      %p181 = pneg %p36
      %p182 = pneg %p33
      %p183 = scmp.lt.s32.totalorder %s15, 1
      %s184 = scalar_select %p183, %s15, 1
      %s185 = scalar_lea.vmem %s1, %s184
      %p186 = pneg %p62
      %p187 = pneg %p59
      %p188 = pneg %p83
      %p189 = pneg %p80
      %p190 = pneg %p104
      %p191 = pneg %p101
      %p192 = pneg %p130
      %p193 = pneg %p127
      %p194 = scmp.lt.s32.totalorder %s15, 1
      %s195 = scalar_select %p194, %s15, 1
      %s196 = smul.addr %s195, 2
      %s197 = smul.addr %s196, 8
      %s198 = scalar_lea.vmem %s4, %s197
      %p199 = scmp.lt.s32.totalorder %s15, 1
      %s200 = scalar_select %p199, %s15, 1
      %s201 = smul.addr %s200, 2
      %s202 = smul.addr %s201, 8
      %s203 = scalar_lea.vmem %s0, %s202
      %p204 = scmp.lt.s32.totalorder %s15, 1
      %s205 = scalar_select %p204, %s15, 1
      %s206 = scalar_lea.vmem %s1, %s205
      %p207 = scmp.lt.s32.totalorder %s15, 1
      %s208 = scalar_select %p207, %s15, 1
      %s209 = smul.addr %s208, 2
      %s210 = smul.addr %s209, 8
      %s211 = scalar_lea.vmem %s4, %s210
      %v213 = vld [vmem:[%s203] sm:$0xff]
      %v214 = vld [vmem:[%s203 + $0x8] sm:$0xff]
      %v215 = vld [vmem:[%s206] sm:$0x1]
      %v216 = vld [vmem:[%s3] sm:$0x1]
      %v217 = vld [vmem:[%s3 + $0x1] sm:$0x1]
      %vm218 = vcmask 261120
      %v219 = vsel %vm218, %v213, 0.0
      %220 = vadd.xlane.f32.xlu0 %v219
      %v221 = vpop.xlane.xlu0 %220
      %v222 = vsel %vm218, %v214, 0.0
      %223 = vadd.xlane.f32.xlu0 %v222
      %v224 = vpop.xlane.xlu0 %223
      %v225 = vrcp.pop 32.0
      %v226 = vmul.f32 %v221, %v225
      %v227 = vmul.f32 %v224, %v225
      %v228 = vsub.f32 %v213, %v226
      %v229 = vsub.f32 %v214, %v227
      %v230 = vmul.f32 %v228, %v228
      %v231 = vmul.f32 %v229, %v229
      %v232 = vsel %vm218, %v230, 0.0
      %233 = vadd.xlane.f32.xlu0 %v232
      %v234 = vpop.xlane.xlu0 %233
      %v235 = vsel %vm218, %v231, 0.0
      %236 = vadd.xlane.f32.xlu0 %v235
      %v237 = vpop.xlane.xlu0 %236
      %v238 = vmul.f32 %v234, %v225
      %v239 = vmul.f32 %v237, %v225
      %v240 = vadd.f32 %v238, 1e-05
      %v241 = vadd.f32 %v239, 1e-05
      %v242 = vrsqrt.pop %v240
      %v243 = vrsqrt.pop %v241
      %v244 = vmul.f32 %v228, %v242
      %v245 = vmul.f32 %v229, %v243
      %v246 = vlaneseq
      %v247 = vshrl.u32 %v246, 7
      %v248 = vsub.s32 0, %v247
      %v249 = vrot.slane %v216, %v248
      %v250 = vmul.f32 %v244, %v249
      %v251 = vmul.f32 %v245, %v249
      %v252 = vlaneseq
      %v253 = vshrl.u32 %v252, 7
      %v254 = vsub.s32 0, %v253
      %v255 = vrot.slane %v217, %v254
      %v256 = vadd.f32 %v250, %v255
      %v257 = vadd.f32 %v251, %v255
      %v258 = vld [vmem:[%s2] sm:$0xf]
      %v259 = vld [vmem:[%s2 + $0x4] sm:$0xf]
      %v260 = vld [vmem:[%s2 + $0x8] sm:$0xf]
      %v261 = vld [vmem:[%s2 + $0xc] sm:$0xf]
      %v262 = vpack.c.bf16 %v257, %v256
      %v263 = vld [vmem:[%s3 + $0x2] sm:$0x1]
      %v264 = vlaneseq
      %v265 = vshrl.u32 %v264, 7
      %v266 = vsub.s32 0, %v265
      %v267 = vrot.slane %v263, %v266
      %v272 = vunpack.c.l.b16 %v258
      %v273 = vunpack.c.l.b16 %v259
      %v274 = vunpack.c.l.b16 %v260
      %v275 = vunpack.c.l.b16 %v261
      %v276 = vpack.c.b16 %v273, %v272
      %v277 = vpack.c.b16 %v275, %v274
      %v281 = vsel %vm218, %v262, 0
      %283 = vmatprep.subr.bf16.mxu0 0
      %284 = vmatpush1.bf16.msra.mxu0 0
      %285 = vmatprep.subr.bf16.mxu0 0
      %286 = vmatpush1.bf16.msra.mxu0 0
      %287 = vmatprep.subr.bf16.mxu0 0
      %288 = vmatpush1.bf16.msra.mxu0 0
      %289 = vmatprep.subr.bf16.mxu0 0
      %290 = vmatpush1.bf16.msra.mxu0 0
      %291 = vmatprep.subr.bf16.mxu0 0
      %292 = vmatpush1.bf16.msra.mxu0 0
      %293 = vmatprep.subr.bf16.mxu0 0
      %294 = vmatpush1.bf16.msra.mxu0 0
      %295 = vmatprep.subr.bf16.mxu0 0
      %296 = vmatpush1.bf16.msra.mxu0 %v277
      %297 = vmatprep.subr.bf16.mxu0 0
      %298 = vmatpush1.bf16.msra.mxu0 %v276
      %299 = vmatprep.subr.bf16.mxu0 0
      %300 = vmatpush2.bf16.msra.mxu0 0
      %301 = vmatprep.subr.bf16.mxu0 0
      %302 = vmatpush2.bf16.msra.mxu0 0
      %303 = vmatprep.subr.bf16.mxu0 0
      %304 = vmatpush2.bf16.msra.mxu0 0
      %305 = vmatprep.subr.bf16.mxu0 0
      %306 = vmatpush2.bf16.msra.mxu0 0
      %307 = vmatprep.subr.bf16.mxu0 0
      %308 = vmatpush2.bf16.msra.mxu0 0
      %309 = vmatprep.subr.bf16.mxu0 0
      %310 = vmatpush2.bf16.msra.mxu0 0
      %311 = vmatprep.subr.bf16.mxu0 0
      %312 = vmatpush2.bf16.msra.mxu0 0
      %313 = vmatprep.subr.bf16.mxu0 0
      %314 = vmatpush2.bf16.msra.mxu0 0
      %315 = vmatprep.mubr.bf16.mxu0 0
      %316 = vmatmul.mubr.bf16.gmra.mxu0 %v281
      %v317 = vpop.f32.mrf.mxu0
      %v318 = vadd.f32 %v267, %v317
      %v319 = vpop.f32.mrf.mxu0
      %v320 = vpop.f32.mrf.mxu0
      %v321 = vadd.f32 %v267, %v320
      %v322 = vpop.f32.mrf.mxu0
      %323 = vdwg.mxu0
      %v324 = vmul.f32 %v318, %v318
      %v325 = vmul.f32 %v321, %v321
      %v326 = vmul.f32 %v318, %v324
      %v327 = vmul.f32 %v321, %v325
      %v328 = vmul.f32 %v326, 0.044715
      %v329 = vmul.f32 %v327, 0.044715
      %v330 = vadd.f32 %v318, %v328
      %v331 = vadd.f32 %v321, %v329
      %v332 = vmul.f32 %v330, 0.7978846
      %v333 = vmul.f32 %v331, 0.7978846
      %v334 = vtanh.pop %v332
      %v335 = vtanh.pop %v333
      %v336 = vadd.f32 %v334, 1.0
      %v337 = vadd.f32 %v335, 1.0
      %v338 = vmul.f32 %v336, 0.5
      %v339 = vmul.f32 %v337, 0.5
      %v340 = vmul.f32 %v318, %v338
      %v341 = vmul.f32 %v321, %v339
      %v342 = vld [vmem:[%s3 + $0x3] sm:$0x1]
      %v343 = vld [vmem:[%s3 + $0x4] sm:$0x1]
      %vm344 = vcmask 130048
      %v345 = vsel %vm344, %v340, 0.0
      %346 = vadd.xlane.f32.xlu0 %v345
      %v347 = vpop.xlane.xlu0 %346
      %v348 = vsel %vm344, %v341, 0.0
      %349 = vadd.xlane.f32.xlu0 %v348
      %v350 = vpop.xlane.xlu0 %349
      %v351 = vrcp.pop 16.0
      %v352 = vmul.f32 %v347, %v351
      %v353 = vmul.f32 %v350, %v351
      %v354 = vsub.f32 %v340, %v352
      %v355 = vsub.f32 %v341, %v353
      %v356 = vmul.f32 %v354, %v354
      %v357 = vmul.f32 %v355, %v355
      %v358 = vsel %vm344, %v356, 0.0
      %359 = vadd.xlane.f32.xlu0 %v358
      %v360 = vpop.xlane.xlu0 %359
      %v361 = vsel %vm344, %v357, 0.0
      %362 = vadd.xlane.f32.xlu0 %v361
      %v363 = vpop.xlane.xlu0 %362
      %v364 = vmul.f32 %v360, %v351
      %v365 = vmul.f32 %v363, %v351
      %v366 = vadd.f32 %v364, 1e-05
      %v367 = vadd.f32 %v365, 1e-05
      %v368 = vrsqrt.pop %v366
      %v369 = vrsqrt.pop %v367
      %v370 = vmul.f32 %v354, %v368
      %v371 = vmul.f32 %v355, %v369
      %v372 = vlaneseq
      %v373 = vshrl.u32 %v372, 7
      %v374 = vsub.s32 0, %v373
      %v375 = vrot.slane %v342, %v374
      %v376 = vmul.f32 %v370, %v375
      %v377 = vmul.f32 %v371, %v375
      %v378 = vlaneseq
      %v379 = vshrl.u32 %v378, 7
      %v380 = vsub.s32 0, %v379
      %v381 = vrot.slane %v343, %v380
      %v382 = vadd.f32 %v376, %v381
      %v383 = vadd.f32 %v377, %v381
      %v384 = vld [vmem:[%s2 + $0x10] sm:$0xf]
      %v385 = vld [vmem:[%s2 + $0x14] sm:$0xf]
      %v386 = vpack.c.bf16 %v383, %v382
      %v387 = vld [vmem:[%s3 + $0x5] sm:$0x1]
      %v388 = vlaneseq
      %v389 = vshrl.u32 %v388, 7
      %v390 = vsub.s32 0, %v389
      %v391 = vrot.slane %v387, %v390
      %v394 = vunpack.c.l.b16 %v384
      %v395 = vunpack.c.l.b16 %v385
      %v396 = vpack.c.b16 %v395, %v394
      %v399 = vsel %vm344, %v386, 0
      %401 = vmatprep.subr.bf16.mxu0 0
      %402 = vmatpush1.bf16.msra.mxu0 0
      %403 = vmatprep.subr.bf16.mxu0 0
      %404 = vmatpush1.bf16.msra.mxu0 0
      %405 = vmatprep.subr.bf16.mxu0 0
      %406 = vmatpush1.bf16.msra.mxu0 0
      %407 = vmatprep.subr.bf16.mxu0 0
      %408 = vmatpush1.bf16.msra.mxu0 0
      %409 = vmatprep.subr.bf16.mxu0 0
      %410 = vmatpush1.bf16.msra.mxu0 0
      %411 = vmatprep.subr.bf16.mxu0 0
      %412 = vmatpush1.bf16.msra.mxu0 0
      %413 = vmatprep.subr.bf16.mxu0 0
      %414 = vmatpush1.bf16.msra.mxu0 0
      %415 = vmatprep.subr.bf16.mxu0 0
      %416 = vmatpush1.bf16.msra.mxu0 %v396
      %417 = vmatprep.subr.bf16.mxu0 0
      %418 = vmatpush2.bf16.msra.mxu0 0
      %419 = vmatprep.subr.bf16.mxu0 0
      %420 = vmatpush2.bf16.msra.mxu0 0
      %421 = vmatprep.subr.bf16.mxu0 0
      %422 = vmatpush2.bf16.msra.mxu0 0
      %423 = vmatprep.subr.bf16.mxu0 0
      %424 = vmatpush2.bf16.msra.mxu0 0
      %425 = vmatprep.subr.bf16.mxu0 0
      %426 = vmatpush2.bf16.msra.mxu0 0
      %427 = vmatprep.subr.bf16.mxu0 0
      %428 = vmatpush2.bf16.msra.mxu0 0
      %429 = vmatprep.subr.bf16.mxu0 0
      %430 = vmatpush2.bf16.msra.mxu0 0
      %431 = vmatprep.subr.bf16.mxu0 0
      %432 = vmatpush2.bf16.msra.mxu0 0
      %433 = vmatprep.mubr.bf16.mxu0 0
      %434 = vmatmul.mubr.bf16.gmra.mxu0 %v399
      %v435 = vpop.f32.mrf.mxu0
      %v436 = vadd.f32 %v391, %v435
      %v437 = vpop.f32.mrf.mxu0
      %v438 = vpop.f32.mrf.mxu0
      %v439 = vadd.f32 %v391, %v438
      %v440 = vpop.f32.mrf.mxu0
      %441 = vdwg.mxu0
      %v442 = vmul.f32 %v436, %v436
      %v443 = vmul.f32 %v439, %v439
      %v444 = vmul.f32 %v436, %v442
      %v445 = vmul.f32 %v439, %v443
      %v446 = vmul.f32 %v444, 0.044715
      %v447 = vmul.f32 %v445, 0.044715
      %v448 = vadd.f32 %v436, %v446
      %v449 = vadd.f32 %v439, %v447
      %v450 = vmul.f32 %v448, 0.7978846
      %v451 = vmul.f32 %v449, 0.7978846
      %v452 = vtanh.pop %v450
      %v453 = vtanh.pop %v451
      %v454 = vadd.f32 %v452, 1.0
      %v455 = vadd.f32 %v453, 1.0
      %v456 = vmul.f32 %v454, 0.5
      %v457 = vmul.f32 %v455, 0.5
      %v458 = vmul.f32 %v436, %v456
      %v459 = vmul.f32 %v439, %v457
      %v460 = vld [vmem:[%s3 + $0x6] sm:$0x1]
      %v461 = vld [vmem:[%s3 + $0x7] sm:$0x1]
      %v462 = vsel %vm344, %v458, 0.0
      %463 = vadd.xlane.f32.xlu0 %v462
      %v464 = vpop.xlane.xlu0 %463
      %v465 = vsel %vm344, %v459, 0.0
      %466 = vadd.xlane.f32.xlu0 %v465
      %v467 = vpop.xlane.xlu0 %466
      %v468 = vmul.f32 %v464, %v351
      %v469 = vmul.f32 %v467, %v351
      %v470 = vsub.f32 %v458, %v468
      %v471 = vsub.f32 %v459, %v469
      %v472 = vmul.f32 %v470, %v470
      %v473 = vmul.f32 %v471, %v471
      %v474 = vsel %vm344, %v472, 0.0
      %475 = vadd.xlane.f32.xlu0 %v474
      %v476 = vpop.xlane.xlu0 %475
      %v477 = vsel %vm344, %v473, 0.0
      %478 = vadd.xlane.f32.xlu0 %v477
      %v479 = vpop.xlane.xlu0 %478
      %v480 = vmul.f32 %v476, %v351
      %v481 = vmul.f32 %v479, %v351
      %v482 = vadd.f32 %v480, 1e-05
      %v483 = vadd.f32 %v481, 1e-05
      %v484 = vrsqrt.pop %v482
      %v485 = vrsqrt.pop %v483
      %v486 = vmul.f32 %v470, %v484
      %v487 = vmul.f32 %v471, %v485
      %v488 = vlaneseq
      %v489 = vshrl.u32 %v488, 7
      %v490 = vsub.s32 0, %v489
      %v491 = vrot.slane %v460, %v490
      %v492 = vmul.f32 %v486, %v491
      %v493 = vmul.f32 %v487, %v491
      %v494 = vlaneseq
      %v495 = vshrl.u32 %v494, 7
      %v496 = vsub.s32 0, %v495
      %v497 = vrot.slane %v461, %v496
      %v498 = vadd.f32 %v492, %v497
      %v499 = vadd.f32 %v493, %v497
      %v500 = vld [vmem:[%s2 + $0x18] sm:$0xf]
      %v501 = vld [vmem:[%s2 + $0x1c] sm:$0xf]
      %v502 = vpack.c.bf16 %v499, %v498
      %v503 = vld [vmem:[%s3 + $0x8] sm:$0x1]
      %v504 = vlaneseq
      %v505 = vshrl.u32 %v504, 7
      %v506 = vsub.s32 0, %v505
      %v507 = vrot.slane %v503, %v506
      %v510 = vunpack.c.l.b16 %v500
      %v511 = vunpack.c.l.b16 %v501
      %v512 = vpack.c.b16 %v511, %v510
      %v515 = vsel %vm344, %v502, 0
      %517 = vmatprep.subr.bf16.mxu0 0
      %518 = vmatpush1.bf16.msra.mxu0 0
      %519 = vmatprep.subr.bf16.mxu0 0
      %520 = vmatpush1.bf16.msra.mxu0 0
      %521 = vmatprep.subr.bf16.mxu0 0
      %522 = vmatpush1.bf16.msra.mxu0 0
      %523 = vmatprep.subr.bf16.mxu0 0
      %524 = vmatpush1.bf16.msra.mxu0 0
      %525 = vmatprep.subr.bf16.mxu0 0
      %526 = vmatpush1.bf16.msra.mxu0 0
      %527 = vmatprep.subr.bf16.mxu0 0
      %528 = vmatpush1.bf16.msra.mxu0 0
      %529 = vmatprep.subr.bf16.mxu0 0
      %530 = vmatpush1.bf16.msra.mxu0 0
      %531 = vmatprep.subr.bf16.mxu0 0
      %532 = vmatpush1.bf16.msra.mxu0 %v512
      %533 = vmatprep.subr.bf16.mxu0 0
      %534 = vmatpush2.bf16.msra.mxu0 0
      %535 = vmatprep.subr.bf16.mxu0 0
      %536 = vmatpush2.bf16.msra.mxu0 0
      %537 = vmatprep.subr.bf16.mxu0 0
      %538 = vmatpush2.bf16.msra.mxu0 0
      %539 = vmatprep.subr.bf16.mxu0 0
      %540 = vmatpush2.bf16.msra.mxu0 0
      %541 = vmatprep.subr.bf16.mxu0 0
      %542 = vmatpush2.bf16.msra.mxu0 0
      %543 = vmatprep.subr.bf16.mxu0 0
      %544 = vmatpush2.bf16.msra.mxu0 0
      %545 = vmatprep.subr.bf16.mxu0 0
      %546 = vmatpush2.bf16.msra.mxu0 0
      %547 = vmatprep.subr.bf16.mxu0 0
      %548 = vmatpush2.bf16.msra.mxu0 0
      %549 = vmatprep.mubr.bf16.mxu0 0
      %550 = vmatmul.mubr.bf16.gmra.mxu0 %v515
      %v551 = vpop.f32.mrf.mxu0
      %v552 = vadd.f32 %v507, %v551
      %v553 = vpop.f32.mrf.mxu0
      %v554 = vpop.f32.mrf.mxu0
      %v555 = vadd.f32 %v507, %v554
      %v556 = vpop.f32.mrf.mxu0
      %557 = vdwg.mxu0
      %v558 = vpack.c.bf16 %v555, %v552
      %v559 = vmul.f32 %v215, -1e+09
      %v561 = vlaneseq
      %v562 = vshrl.u32 %v561, 7
      %v563 = vsub.s32 0, %v562
      %v564 = vrot.slane %v559, %v563
      %567 = vrot.lane.b32.xlu0 %v558, 112
      %v568 = vpop.permute.xlu0 %567
      %v570 = vsel %vm344, %v558, 0
      %v573 = vsel %vm344, %v568, 0
      %575 = vmatprep.subr.bf16.mxu0 0
      %576 = vmatpush1.bf16.xpose.msra.mxu0 0
      %577 = vmatprep.subr.bf16.mxu0 0
      %578 = vmatpush1.bf16.xpose.msra.mxu0 0
      %579 = vmatprep.subr.bf16.mxu0 0
      %580 = vmatpush1.bf16.xpose.msra.mxu0 0
      %581 = vmatprep.subr.bf16.mxu0 0
      %582 = vmatpush1.bf16.xpose.msra.mxu0 0
      %583 = vmatprep.subr.bf16.mxu0 0
      %584 = vmatpush1.bf16.xpose.msra.mxu0 0
      %585 = vmatprep.subr.bf16.mxu0 0
      %586 = vmatpush1.bf16.xpose.msra.mxu0 0
      %587 = vmatprep.subr.bf16.mxu0 0
      %588 = vmatpush1.bf16.xpose.msra.mxu0 0
      %589 = vmatprep.subr.bf16.mxu0 0
      %590 = vmatpush1.bf16.xpose.msra.mxu0 %v573
      %591 = vmatprep.subr.bf16.mxu0 0
      %592 = vmatpush2.bf16.xpose.msra.mxu0 0
      %593 = vmatprep.subr.bf16.mxu0 0
      %594 = vmatpush2.bf16.xpose.msra.mxu0 0
      %595 = vmatprep.subr.bf16.mxu0 0
      %596 = vmatpush2.bf16.xpose.msra.mxu0 0
      %597 = vmatprep.subr.bf16.mxu0 0
      %598 = vmatpush2.bf16.xpose.msra.mxu0 0
      %599 = vmatprep.subr.bf16.mxu0 0
      %600 = vmatpush2.bf16.xpose.msra.mxu0 0
      %601 = vmatprep.subr.bf16.mxu0 0
      %602 = vmatpush2.bf16.xpose.msra.mxu0 0
      %603 = vmatprep.subr.bf16.mxu0 0
      %604 = vmatpush2.bf16.xpose.msra.mxu0 0
      %605 = vmatprep.subr.bf16.mxu0 0
      %606 = vmatpush2.bf16.xpose.msra.mxu0 0
      %607 = vmatprep.mubr.bf16.mxu0 0
      %608 = vmatmul.mubr.bf16.gmra.mxu0 %v570
      %v609 = vpop.f32.mrf.mxu0
      %v610 = vadd.f32 %v564, %v609
      %v611 = vpop.f32.mrf.mxu0
      %v612 = vpop.f32.mrf.mxu0
      %v613 = vadd.f32 %v564, %v612
      %v614 = vpop.f32.mrf.mxu0
      %615 = vdwg.mxu0
      %v616 = vsel %vm344, %v610, -inf
      %617 = vmax.xlane.f32.xlu0 %v616
      %v618 = vpop.xlane.xlu0 %617
      %v619 = vsel %vm344, %v613, -inf
      %620 = vmax.xlane.f32.xlu0 %v619
      %v621 = vpop.xlane.xlu0 %620
      %v622 = vsub.f32 %v610, %v618
      %v623 = vsub.f32 %v613, %v621
      %v624 = vmul.f32 %v622, 1.442695
      %v625 = vpow.pop %v624
      %v626 = vmul.f32 %v623, 1.442695
      %v627 = vpow.pop %v626
      %v628 = vsel %vm344, %v625, 0.0
      %629 = vadd.xlane.f32.xlu0 %v628
      %v630 = vpop.xlane.xlu0 %629
      %v631 = vsel %vm344, %v627, 0.0
      %632 = vadd.xlane.f32.xlu0 %v631
      %v633 = vpop.xlane.xlu0 %632
      %v634 = vrcp.pop %v630
      %v635 = vrcp.pop %v633
      %v636 = vmul.f32 %v625, %v634
      %v637 = vmul.f32 %v627, %v635
      %v638 = vpack.c.bf16 %v637, %v636
      %639 = vrot.lane.b32.xlu0 %v558, 96
      %v640 = vpop.permute.xlu0 %639
      %v643 = vsel %vm344, %v638, 0
      %645 = vmatprep.subr.bf16.mxu0 0
      %646 = vmatpush1.bf16.msra.mxu0 0
      %647 = vmatprep.subr.bf16.mxu0 0
      %648 = vmatpush1.bf16.msra.mxu0 0
      %649 = vmatprep.subr.bf16.mxu0 0
      %650 = vmatpush1.bf16.msra.mxu0 0
      %651 = vmatprep.subr.bf16.mxu0 0
      %652 = vmatpush1.bf16.msra.mxu0 0
      %653 = vmatprep.subr.bf16.mxu0 0
      %654 = vmatpush1.bf16.msra.mxu0 0
      %655 = vmatprep.subr.bf16.mxu0 0
      %656 = vmatpush1.bf16.msra.mxu0 0
      %657 = vmatprep.subr.bf16.mxu0 0
      %658 = vmatpush1.bf16.msra.mxu0 0
      %659 = vmatprep.subr.bf16.mxu0 0
      %660 = vmatpush1.bf16.msra.mxu0 %v640
      %661 = vmatprep.subr.bf16.mxu0 0
      %662 = vmatpush2.bf16.msra.mxu0 0
      %663 = vmatprep.subr.bf16.mxu0 0
      %664 = vmatpush2.bf16.msra.mxu0 0
      %665 = vmatprep.subr.bf16.mxu0 0
      %666 = vmatpush2.bf16.msra.mxu0 0
      %667 = vmatprep.subr.bf16.mxu0 0
      %668 = vmatpush2.bf16.msra.mxu0 0
      %669 = vmatprep.subr.bf16.mxu0 0
      %670 = vmatpush2.bf16.msra.mxu0 0
      %671 = vmatprep.subr.bf16.mxu0 0
      %672 = vmatpush2.bf16.msra.mxu0 0
      %673 = vmatprep.subr.bf16.mxu0 0
      %674 = vmatpush2.bf16.msra.mxu0 0
      %675 = vmatprep.subr.bf16.mxu0 0
      %676 = vmatpush2.bf16.msra.mxu0 0
      %677 = vmatprep.mubr.bf16.mxu0 0
      %678 = vmatmul.mubr.bf16.gmra.mxu0 %v643
      %v679 = vpop.f32.mrf.mxu0
      %v680 = vadd.f32 0.0, %v679
      %v681 = vpop.f32.mrf.mxu0
      %v682 = vpop.f32.mrf.mxu0
      %v683 = vadd.f32 0.0, %v682
      %v684 = vpop.f32.mrf.mxu0
      %685 = vdwg.mxu0
      %v686 = vld [vmem:[%s2 + $0x20] sm:$0xf]
      %v687 = vld [vmem:[%s2 + $0x24] sm:$0xf]
      %v688 = vpack.c.bf16 %v683, %v680
      %v689 = vld [vmem:[%s3 + $0x9] sm:$0x1]
      %v690 = vlaneseq
      %v691 = vshrl.u32 %v690, 7
      %v692 = vsub.s32 0, %v691
      %v693 = vrot.slane %v689, %v692
      %v696 = vunpack.c.l.b16 %v686
      %v697 = vunpack.c.l.b16 %v687
      %v698 = vpack.c.b16 %v697, %v696
      %v701 = vsel %vm344, %v688, 0
      %703 = vmatprep.subr.bf16.mxu0 0
      %704 = vmatpush1.bf16.msra.mxu0 0
      %705 = vmatprep.subr.bf16.mxu0 0
      %706 = vmatpush1.bf16.msra.mxu0 0
      %707 = vmatprep.subr.bf16.mxu0 0
      %708 = vmatpush1.bf16.msra.mxu0 0
      %709 = vmatprep.subr.bf16.mxu0 0
      %710 = vmatpush1.bf16.msra.mxu0 0
      %711 = vmatprep.subr.bf16.mxu0 0
      %712 = vmatpush1.bf16.msra.mxu0 0
      %713 = vmatprep.subr.bf16.mxu0 0
      %714 = vmatpush1.bf16.msra.mxu0 0
      %715 = vmatprep.subr.bf16.mxu0 0
      %716 = vmatpush1.bf16.msra.mxu0 0
      %717 = vmatprep.subr.bf16.mxu0 0
      %718 = vmatpush1.bf16.msra.mxu0 %v698
      %719 = vmatprep.subr.bf16.mxu0 0
      %720 = vmatpush2.bf16.msra.mxu0 0
      %721 = vmatprep.subr.bf16.mxu0 0
      %722 = vmatpush2.bf16.msra.mxu0 0
      %723 = vmatprep.subr.bf16.mxu0 0
      %724 = vmatpush2.bf16.msra.mxu0 0
      %725 = vmatprep.subr.bf16.mxu0 0
      %726 = vmatpush2.bf16.msra.mxu0 0
      %727 = vmatprep.subr.bf16.mxu0 0
      %728 = vmatpush2.bf16.msra.mxu0 0
      %729 = vmatprep.subr.bf16.mxu0 0
      %730 = vmatpush2.bf16.msra.mxu0 0
      %731 = vmatprep.subr.bf16.mxu0 0
      %732 = vmatpush2.bf16.msra.mxu0 0
      %733 = vmatprep.subr.bf16.mxu0 0
      %734 = vmatpush2.bf16.msra.mxu0 0
      %735 = vmatprep.mubr.bf16.mxu0 0
      %736 = vmatmul.mubr.bf16.gmra.mxu0 %v701
      %v737 = vpop.f32.mrf.mxu0
      %v738 = vadd.f32 %v693, %v737
      %v739 = vpop.f32.mrf.mxu0
      %v740 = vpop.f32.mrf.mxu0
      %v741 = vadd.f32 %v693, %v740
      %v742 = vpop.f32.mrf.mxu0
      %743 = vdwg.mxu0
      %v744 = vadd.f32 %v213, %v738
      %v745 = vadd.f32 %v214, %v741
      %v746 = vld [vmem:[%s3 + $0xa] sm:$0x1]
      %v747 = vld [vmem:[%s3 + $0xb] sm:$0x1]
      %v748 = vsel %vm218, %v744, 0.0
      %749 = vadd.xlane.f32.xlu0 %v748
      %v750 = vpop.xlane.xlu0 %749
      %v751 = vsel %vm218, %v745, 0.0
      %752 = vadd.xlane.f32.xlu0 %v751
      %v753 = vpop.xlane.xlu0 %752
      %v754 = vmul.f32 %v750, %v225
      %v755 = vmul.f32 %v753, %v225
      %v756 = vsub.f32 %v744, %v754
      %v757 = vsub.f32 %v745, %v755
      %v758 = vmul.f32 %v756, %v756
      %v759 = vmul.f32 %v757, %v757
      %v760 = vsel %vm218, %v758, 0.0
      %761 = vadd.xlane.f32.xlu0 %v760
      %v762 = vpop.xlane.xlu0 %761
      %v763 = vsel %vm218, %v759, 0.0
      %764 = vadd.xlane.f32.xlu0 %v763
      %v765 = vpop.xlane.xlu0 %764
      %v766 = vmul.f32 %v762, %v225
      %v767 = vmul.f32 %v765, %v225
      %v768 = vadd.f32 %v766, 1e-05
      %v769 = vadd.f32 %v767, 1e-05
      %v770 = vrsqrt.pop %v768
      %v771 = vrsqrt.pop %v769
      %v772 = vmul.f32 %v756, %v770
      %v773 = vmul.f32 %v757, %v771
      %v774 = vlaneseq
      %v775 = vshrl.u32 %v774, 7
      %v776 = vsub.s32 0, %v775
      %v777 = vrot.slane %v746, %v776
      %v778 = vmul.f32 %v772, %v777
      %v779 = vmul.f32 %v773, %v777
      %v780 = vlaneseq
      %v781 = vshrl.u32 %v780, 7
      %v782 = vsub.s32 0, %v781
      %v783 = vrot.slane %v747, %v782
      %v784 = vadd.f32 %v778, %v783
      %v785 = vadd.f32 %v779, %v783
      %v786 = vld [vmem:[%s2 + $0x28] sm:$0xf]
      %v787 = vld [vmem:[%s2 + $0x2c] sm:$0xf]
      %v788 = vld [vmem:[%s2 + $0x30] sm:$0xf]
      %v789 = vld [vmem:[%s2 + $0x34] sm:$0xf]
      %v790 = vpack.c.bf16 %v785, %v784
      %v791 = vld [vmem:[%s3 + $0xc] sm:$0x1]
      %v792 = vlaneseq
      %v793 = vshrl.u32 %v792, 7
      %v794 = vsub.s32 0, %v793
      %v795 = vrot.slane %v791, %v794
      %v800 = vunpack.c.l.b16 %v786
      %v801 = vunpack.c.l.b16 %v787
      %v802 = vunpack.c.l.b16 %v788
      %v803 = vunpack.c.l.b16 %v789
      %v804 = vpack.c.b16 %v801, %v800
      %v805 = vpack.c.b16 %v803, %v802
      %v809 = vsel %vm218, %v790, 0
      %811 = vmatprep.subr.bf16.mxu0 0
      %812 = vmatpush1.bf16.msra.mxu0 0
      %813 = vmatprep.subr.bf16.mxu0 0
      %814 = vmatpush1.bf16.msra.mxu0 0
      %815 = vmatprep.subr.bf16.mxu0 0
      %816 = vmatpush1.bf16.msra.mxu0 0
      %817 = vmatprep.subr.bf16.mxu0 0
      %818 = vmatpush1.bf16.msra.mxu0 0
      %819 = vmatprep.subr.bf16.mxu0 0
      %820 = vmatpush1.bf16.msra.mxu0 0
      %821 = vmatprep.subr.bf16.mxu0 0
      %822 = vmatpush1.bf16.msra.mxu0 0
      %823 = vmatprep.subr.bf16.mxu0 0
      %824 = vmatpush1.bf16.msra.mxu0 %v805
      %825 = vmatprep.subr.bf16.mxu0 0
      %826 = vmatpush1.bf16.msra.mxu0 %v804
      %827 = vmatprep.subr.bf16.mxu0 0
      %828 = vmatpush2.bf16.msra.mxu0 0
      %829 = vmatprep.subr.bf16.mxu0 0
      %830 = vmatpush2.bf16.msra.mxu0 0
      %831 = vmatprep.subr.bf16.mxu0 0
      %832 = vmatpush2.bf16.msra.mxu0 0
      %833 = vmatprep.subr.bf16.mxu0 0
      %834 = vmatpush2.bf16.msra.mxu0 0
      %835 = vmatprep.subr.bf16.mxu0 0
      %836 = vmatpush2.bf16.msra.mxu0 0
      %837 = vmatprep.subr.bf16.mxu0 0
      %838 = vmatpush2.bf16.msra.mxu0 0
      %839 = vmatprep.subr.bf16.mxu0 0
      %840 = vmatpush2.bf16.msra.mxu0 0
      %841 = vmatprep.subr.bf16.mxu0 0
      %842 = vmatpush2.bf16.msra.mxu0 0
      %843 = vmatprep.mubr.bf16.mxu0 0
      %844 = vmatmul.mubr.bf16.gmra.mxu0 %v809
      %v845 = vpop.f32.mrf.mxu0
      %v846 = vadd.f32 %v795, %v845
      %v847 = vpop.f32.mrf.mxu0
      %v848 = vpop.f32.mrf.mxu0
      %v849 = vadd.f32 %v795, %v848
      %v850 = vpop.f32.mrf.mxu0
      %851 = vdwg.mxu0
      %v852 = vmul.f32 %v846, %v846
      %v853 = vmul.f32 %v849, %v849
      %v854 = vmul.f32 %v846, %v852
      %v855 = vmul.f32 %v849, %v853
      %v856 = vmul.f32 %v854, 0.044715
      %v857 = vmul.f32 %v855, 0.044715
      %v858 = vadd.f32 %v846, %v856
      %v859 = vadd.f32 %v849, %v857
      %v860 = vmul.f32 %v858, 0.7978846
      %v861 = vmul.f32 %v859, 0.7978846
      %v862 = vtanh.pop %v860
      %v863 = vtanh.pop %v861
      %v864 = vadd.f32 %v862, 1.0
      %v865 = vadd.f32 %v863, 1.0
      %v866 = vmul.f32 %v864, 0.5
      %v867 = vmul.f32 %v865, 0.5
      %v868 = vmul.f32 %v846, %v866
      %v869 = vmul.f32 %v849, %v867
      %v870 = vld [vmem:[%s2 + $0x38] sm:$0xf]
      %v871 = vpack.c.bf16 %v869, %v868
      %v872 = vld [vmem:[%s3 + $0xd] sm:$0x1]
      %v873 = vlaneseq
      %v874 = vshrl.u32 %v873, 7
      %v875 = vsub.s32 0, %v874
      %v876 = vrot.slane %v872, %v875
      %vm877 = vcmask 64512
      %v879 = vsel %vm877, %v871, 0
      %vm881 = vcmask 1043456
      %v883 = vsel %vm881, %v870, 0
      %885 = vmatprep.subr.bf16.mxu0 0
      %886 = vmatpush1.bf16.msra.mxu0 0
      %887 = vmatprep.subr.bf16.mxu0 0
      %888 = vmatpush1.bf16.msra.mxu0 0
      %889 = vmatprep.subr.bf16.mxu0 0
      %890 = vmatpush1.bf16.msra.mxu0 0
      %891 = vmatprep.subr.bf16.mxu0 0
      %892 = vmatpush1.bf16.msra.mxu0 0
      %893 = vmatprep.subr.bf16.mxu0 0
      %894 = vmatpush1.bf16.msra.mxu0 0
      %895 = vmatprep.subr.bf16.mxu0 0
      %896 = vmatpush1.bf16.msra.mxu0 0
      %897 = vmatprep.subr.bf16.mxu0 0
      %898 = vmatpush1.bf16.msra.mxu0 0
      %899 = vmatprep.subr.bf16.mxu0 0
      %900 = vmatpush1.bf16.msra.mxu0 %v883
      %901 = vmatprep.subr.bf16.mxu0 0
      %902 = vmatpush2.bf16.msra.mxu0 0
      %903 = vmatprep.subr.bf16.mxu0 0
      %904 = vmatpush2.bf16.msra.mxu0 0
      %905 = vmatprep.subr.bf16.mxu0 0
      %906 = vmatpush2.bf16.msra.mxu0 0
      %907 = vmatprep.subr.bf16.mxu0 0
      %908 = vmatpush2.bf16.msra.mxu0 0
      %909 = vmatprep.subr.bf16.mxu0 0
      %910 = vmatpush2.bf16.msra.mxu0 0
      %911 = vmatprep.subr.bf16.mxu0 0
      %912 = vmatpush2.bf16.msra.mxu0 0
      %913 = vmatprep.subr.bf16.mxu0 0
      %914 = vmatpush2.bf16.msra.mxu0 0
      %915 = vmatprep.subr.bf16.mxu0 0
      %916 = vmatpush2.bf16.msra.mxu0 0
      %917 = vmatprep.mubr.bf16.mxu0 0
      %918 = vmatmul.mubr.bf16.gmra.mxu0 %v879
      %v919 = vpop.f32.mrf.mxu0
      %v920 = vadd.f32 %v876, %v919
      %v921 = vpop.f32.mrf.mxu0
      %v922 = vpop.f32.mrf.mxu0
      %v923 = vadd.f32 %v876, %v922
      %v924 = vpop.f32.mrf.mxu0
      %925 = vdwg.mxu0
      %v926 = vadd.f32 %v744, %v920
      %v927 = vadd.f32 %v745, %v923
      %928 = vst.msk [vmem:[%s211] sm:$0xff] %vm218, %v926
      %929 = vst.msk [vmem:[%s211 + $0x8] sm:$0xff] %vm218, %v927
      %p930 = scmp.lt.s32.totalorder %s15, 1
      %s931 = scalar_select %p930, %s15, 1
      %s932 = smul.addr %s931, 2
      %s933 = smul.addr %s932, 8
      %s934 = scalar_lea.vmem %s4, %s933
      // Predicated region
      $region37: #{inter_region_transformer_encoder.2} parent=35 // pred_check
        %p935 = pneg %p127
      $region38: #{inter_region_transformer_encoder.2} parent=35 // pred_check_branch
        %937 = sbr.rel (%p935) target = $region40
      $region39: #{inter_region_transformer_encoder.2} parent=35 // pred_region
        _
      $region40: #{inter_region_transformer_encoder.2} parent=35 // pred_fallthru
        _
    $region36: #{inter_region_transformer_encoder.2} parent=5 // pred_fallthru
      _
    %p938 = scmp.le.s32.totalorder 2, %s10
    // Predicated region
    $region41: #{inter_region_transformer_encoder.2} parent=5 // pred_check
      %p939 = pneg %p938
    $region42: #{inter_region_transformer_encoder.2} parent=5 // pred_check_branch
      %941 = sbr.rel (%p939) target = $region44
    $region43: #{inter_region_transformer_encoder.2} parent=5 // pred_region
      %s942 = ssub.s32 %s10, 2
      // Predicated region
      $region45: #{inter_region_transformer_encoder.2} parent=43 // pred_check
        %p943 = pneg %p133
      $region46: #{inter_region_transformer_encoder.2} parent=43 // pred_check_branch
        %945 = sbr.rel (%p943) target = $region48
      $region47: #{inter_region_transformer_encoder.2} parent=43 // pred_region
        %p946 = scmp.lt.s32.totalorder %s16, 1
        %s947 = scalar_select %p946, %s16, 1
        %s948 = smul.addr %s947, 2
        %s949 = smul.addr %s948, 8
        %s950 = scalar_lea.vmem %s4, %s949
      $region48: #{inter_region_transformer_encoder.2} parent=43 // pred_fallthru
        _
    $region44: #{inter_region_transformer_encoder.2} parent=5 // pred_fallthru
      _
  $region6: #{inter_region_transformer_encoder.2} parent=0 // loop_footer
    %s14 = sadd.s32 1, %s10
  $region7: #{inter_region_transformer_encoder.2} parent=0 // loop_footer_branch
    %9 = sbr.rel target = $region3
  $region8: #{inter_region_transformer_encoder.2} parent=0 // loop_exit
    _

</llo_original>
